<compile_context>
chip_gen: v5e
topology: v5e:2x2
jax: 0.10.0
libtpu: 0.0.40
codegen_flags: <defaults>
</compile_context>

<pallas_src>
import functools
import math

import jax
import jax.numpy as jnp
from jax.experimental import pallas as pl
from jax.experimental.pallas import tpu as pltpu


def _sublayer_connection2_kernel(x_ref, x2_ref, madj_ref, madjT_ref,
                                 w1_ref, w2_ref, ln_ref,
                                 o1_ref, o2_ref, *, T):
    # Block shapes:
    #   x_ref / x2_ref / o1_ref / o2_ref : (1, N*T, D)  (rows n-major, t-minor)
    #   madj_ref / madjT_ref : (N*T, N*T)   expanded adjacency kron(adj, I_T)
    #   w1_ref / w2_ref : (D, D) bf16  (Theta.weight.T * 1/sqrt(D))
    #   ln_ref : (4, D)  f32  (g1, b1, g2, b2)
    NT = x_ref.shape[1]
    D = x_ref.shape[2]
    scale = 1.0 / math.sqrt(D)

    ln = ln_ref[...].astype(jnp.float32)            # (4, D)
    g1, b1 = ln[0:1, :], ln[1:2, :]
    g2, b2 = ln[2:3, :], ln[3:4, :]

    def layer_norm(v, g, b):                        # nn.LayerNorm(d_model), eps=1e-5
        mu = jnp.mean(v, axis=-1, keepdims=True)
        var = jnp.mean(jnp.square(v - mu), axis=-1, keepdims=True)
        return (v - mu) * jax.lax.rsqrt(var + 1e-5) * g + b

    Xn = layer_norm(x_ref[0].astype(jnp.float32), g1, b1)     # (NT, D)
    Yn = layer_norm(x2_ref[0].astype(jnp.float32), g2, b2)    # (NT, D)
    Xb = Xn.astype(jnp.bfloat16)
    Yb = Yn.astype(jnp.bfloat16)

    # ---- cross spatial attention, all T steps in ONE full-width matmul ----
    # S[i,j] = Xn[i] . Yn[j] / sqrt(D); RHS contracted on its last dim
    # (MXU-native transposed operand — no materialized transpose).
    S = jax.lax.dot_general(Xb, Yb, (((1,), (1,)), ((), ())),
                            preferred_element_type=jnp.float32) * scale   # (NT,NT)

    # The attention is block-diagonal in t: rows/cols whose time index differs
    # must not interact — mask them out of the softmax denominator.
    row_t = jax.lax.broadcasted_iota(jnp.int32, (NT, NT), 0) % T
    col_t = jax.lax.broadcasted_iota(jnp.int32, (NT, NT), 1) % T
    S = jnp.where(row_t == col_t, S, -1e30)
    S = S - jnp.max(S, axis=-1, keepdims=True)
    E = jnp.exp(S)
    # Exact divide (review item: not EUP/VPU bound, approx reciprocal unneeded).
    P = E / jnp.sum(E, axis=-1, keepdims=True)                            # (NT,NT)

    # Expanded adjacency masks already encode adj[n_i,n_j] * [t_i == t_j].
    A1 = (madj_ref[...] * P).astype(jnp.bfloat16)     # adj   (x) I_T  .* P
    A2 = (madjT_ref[...] * P).astype(jnp.bfloat16)    # adj^T (x) I_T  .* P

    # Z1[i] = sum_j A1[i,j] * Yn[j]        (one (128,128)@(128,32) push)
    Z1 = jnp.dot(A1, Yb, preferred_element_type=jnp.float32)              # (NT,D)
    # Z2[i] = sum_j A2[j,i] * Xn[j]        (LHS contracted on dim 0 — the MXU
    # consumes the transposed operand natively; no P^T is ever materialized)
    Z2 = jax.lax.dot_general(A2, Xb, (((0,), (0,)), ((), ())),
                             preferred_element_type=jnp.float32)          # (NT,D)

    # Theta1 / Theta2 (+ folded post-softmax 1/sqrt(D)) + ReLU: one full
    # 128-row MXU push per stream.
    O1 = jnp.maximum(jnp.dot(Z1.astype(jnp.bfloat16), w1_ref[...],
                             preferred_element_type=jnp.float32), 0.0)
    O2 = jnp.maximum(jnp.dot(Z2.astype(jnp.bfloat16), w2_ref[...],
                             preferred_element_type=jnp.float32), 0.0)

    # Residual on the *raw* inputs, re-read from the resident VMEM block just
    # before the store (keeps vreg pressure low through the softmax region).
    o1_ref[0] = (x_ref[0].astype(jnp.float32) + O1).astype(o1_ref.dtype)
    o2_ref[0] = (x2_ref[0].astype(jnp.float32) + O2).astype(o2_ref.dtype)


def sublayer_connection2_forward(x, x2, adj, w1, w2, g1, b1, g2, b2):
    """SublayerConnection2 (residual + LayerNorm) around the cross spatial-
    attention scaled GCN, eval mode (dropout == identity).

    x, x2 : (B, N, T, D)   adj : (N, N)   w1, w2 : (D, D) == Theta.weight.T
    g1, b1, g2, b2 : (D,)  LayerNorm / LayerNorm2 affine params.
    Returns (out1, out2), each (B, N, T, D).
    """
    B, N, T, D = x.shape
    NT = N * T
    # Residual + single fused projection assume F_in == F_out == d_model.
    assert w1.shape == (D, D) and w2.shape == (D, D), "residual needs F_in == F_out"
    assert adj.shape == (N, N)

    # Fold the post-softmax 1/sqrt(D) into the Theta weights; cast MXU weights
    # to bf16 once here (f32 accumulation happens inside the kernel).
    scale_post = 1.0 / math.sqrt(D)
    w1s = (w1.astype(jnp.float32) * scale_post).astype(jnp.bfloat16)
    w2s = (w2.astype(jnp.float32) * scale_post).astype(jnp.bfloat16)
    ln_params = jnp.stack([g1, b1, g2, b2], axis=0).astype(jnp.float32)   # (4, D)

    # Expanded adjacency:  madj[i,j] = adj[i//T, j//T] * [i%T == j%T].
    eye_t = jnp.eye(T, dtype=jnp.float32)
    madj = jnp.kron(adj.astype(jnp.float32), eye_t)      # (NT, NT)
    madj_t = jnp.kron(adj.astype(jnp.float32).T, eye_t)  # = madj.T (general adj)

    # Contiguous (free) reshape to the matmul row layout: (B, N*T, D),
    # rows ordered n-major / t-minor.
    xf = x.reshape(B, NT, D)
    x2f = x2.reshape(B, NT, D)

    io_spec = pl.BlockSpec((1, NT, D), lambda b: (b, 0, 0))

    def resident(shape):
        return pl.BlockSpec(shape, lambda b, _s=shape: (0,) * len(_s))

    kernel = functools.partial(_sublayer_connection2_kernel, T=T)

    o1f, o2f = pl.pallas_call(
        kernel,
        grid=(B,),                      # one step per batch; T fully fused
        in_specs=[
            io_spec,                    # x   (1, NT, D)
            io_spec,                    # x2  (1, NT, D)
            resident((NT, NT)),         # madj   = kron(adj,   I_T)
            resident((NT, NT)),         # madj^T = kron(adj^T, I_T)
            resident((D, D)),           # W1 (bf16, pre-scaled)
            resident((D, D)),           # W2 (bf16, pre-scaled)
            resident((4, D)),           # LayerNorm params
        ],
        out_specs=[io_spec, io_spec],
        out_shape=[
            jax.ShapeDtypeStruct((B, NT, D), x.dtype),
            jax.ShapeDtypeStruct((B, NT, D), x.dtype),
        ],
        compiler_params=pltpu.CompilerParams(
            dimension_semantics=("parallel",),      # 2 TCs on v7x when B >= 2
            vmem_limit_bytes=32 * 1024 * 1024),
    )(xf, x2f, madj, madj_t, w1s, w2s, ln_params)

    return o1f.reshape(B, N, T, D), o2f.reshape(B, N, T, D)


def _reference_forward(x, x2, adj, w1, w2, g1, b1, g2, b2):
    """Pure-JAX (f32) reference mirroring the PyTorch SublayerConnection2
    forward (residual + LayerNorm branch) with the cross-GCN sublayer, eval."""
    B, N, T, D = x.shape

    def ln(v, g, b):
        mu = jnp.mean(v, axis=-1, keepdims=True)
        var = jnp.mean((v - mu) ** 2, axis=-1, keepdims=True)
        return (v - mu) / jnp.sqrt(var + 1e-5) * g + b

    xn, x2n = ln(x, g1, b1), ln(x2, g2, b2)
    xt = jnp.transpose(xn, (0, 2, 1, 3)).reshape(-1, N, D)
    x2t = jnp.transpose(x2n, (0, 2, 1, 3)).reshape(-1, N, D)
    score = jnp.einsum('bnf,bmf->bnm', xt, x2t) / math.sqrt(D)
    score = jax.nn.softmax(score, axis=-1) / math.sqrt(D)
    a1 = adj[None, :, :] * score
    a2 = adj[None, :, :] * jnp.swapaxes(score, 1, 2)
    s1 = jax.nn.relu(jnp.einsum('bnm,bmf->bnf', a1, x2t) @ w1)
    s2 = jax.nn.relu(jnp.einsum('bnm,bmf->bnf', a2, xt) @ w2)
    s1 = jnp.transpose(s1.reshape(B, T, N, D), (0, 2, 1, 3))
    s2 = jnp.transpose(s2.reshape(B, T, N, D), (0, 2, 1, 3))
    # dropout is the identity in eval mode / p=0.
    return x + s1, x2 + s2


if __name__ == "__main__":
    B, N, T, D = 2, 16, 8, 32   # d_model = 32, F_in == F_out (needed for residual)

    key = jax.random.PRNGKey(0)
    kx, kx2, kadj, kw1, kw2, kg1, kb1, kg2, kb2 = jax.random.split(key, 9)

    x = jax.random.normal(kx, (B, N, T, D), dtype=jnp.float32)
    x2 = jax.random.normal(kx2, (B, N, T, D), dtype=jnp.float32)

    # Deterministic symmetric-normalized adjacency: D^{-1/2} (A + I) D^{-1/2}
    a_raw = (jax.random.uniform(kadj, (N, N)) > 0.7).astype(jnp.float32)
    a_sym = jnp.maximum(a_raw, a_raw.T) + jnp.eye(N, dtype=jnp.float32)
    deg = jnp.sum(a_sym, axis=-1)
    d_inv_sqrt = 1.0 / jnp.sqrt(deg)
    adj = a_sym * d_inv_sqrt[:, None] * d_inv_sqrt[None, :]

    # Theta1 / Theta2: nn.Linear(D, D, bias=False); kernel takes weight.T.
    bound = 1.0 / math.sqrt(D)
    theta1_w = jax.random.uniform(kw1, (D, D), minval=-bound, maxval=bound)
    theta2_w = jax.random.uniform(kw2, (D, D), minval=-bound, maxval=bound)
    w1 = theta1_w.T.astype(jnp.float32)
    w2 = theta2_w.T.astype(jnp.float32)

    # LayerNorm / LayerNorm2 affine params (randomized to exercise the math).
    g1 = 1.0 + 0.1 * jax.random.normal(kg1, (D,), dtype=jnp.float32)
    b1 = 0.1 * jax.random.normal(kb1, (D,), dtype=jnp.float32)
    g2 = 1.0 + 0.1 * jax.random.normal(kg2, (D,), dtype=jnp.float32)
    b2 = 0.1 * jax.random.normal(kb2, (D,), dtype=jnp.float32)

    out1, out2 = sublayer_connection2_forward(x, x2, adj, w1, w2, g1, b1, g2, b2)
    out1 = jax.block_until_ready(out1)
    out2 = jax.block_until_ready(out2)

    ref1, ref2 = _reference_forward(x, x2, adj, w1, w2, g1, b1, g2, b2)
    assert out1.shape == (B, N, T, D) and out2.shape == (B, N, T, D)
    # Tolerance covers the deliberate bf16 cast of MXU operands (f32 accumulate,
    # per the performance review); structural errors would be orders of
    # magnitude larger than this.
    assert jnp.allclose(out1, ref1, atol=2e-2, rtol=2e-2), \
        float(jnp.max(jnp.abs(out1 - ref1)))
    assert jnp.allclose(out2, ref2, atol=2e-2, rtol=2e-2), \
        float(jnp.max(jnp.abs(out2 - ref2)))

    print("KERNEL_OK")
</pallas_src>

<mosaic_0001>
module attributes {stable_mosaic.version = 11 : i64} {
  func.func @_sublayer_connection2_kernel(%arg0: i32, %arg1: memref<1x128x32xf32, #tpu.memory_space<vmem>>, %arg2: memref<1x128x32xf32, #tpu.memory_space<vmem>>, %arg3: memref<128x128xf32, #tpu.memory_space<vmem>>, %arg4: memref<128x128xf32, #tpu.memory_space<vmem>>, %arg5: memref<32x32xbf16, #tpu.memory_space<vmem>>, %arg6: memref<32x32xbf16, #tpu.memory_space<vmem>>, %arg7: memref<4x32xf32, #tpu.memory_space<vmem>>, %arg8: memref<1x128x32xf32, #tpu.memory_space<vmem>>, %arg9: memref<1x128x32xf32, #tpu.memory_space<vmem>>) attributes {dimension_semantics = [#tpu.dimension_semantics<parallel>], iteration_bounds = array<i64: 2>, scalar_prefetch = 0 : i64, scratch_operands = 0 : i64, tpu.core_type = #tpu.core_type<tc>, window_params = [{transform_indices = @transform_0, window_bounds = array<i64: 1, 128, 32>}, {transform_indices = @transform_1, window_bounds = array<i64: 1, 128, 32>}, {pipeline_mode = #tpu.pipeline_mode<synchronous>, transform_indices = @transform_2, window_bounds = array<i64: 128, 128>}, {pipeline_mode = #tpu.pipeline_mode<synchronous>, transform_indices = @transform_3, window_bounds = array<i64: 128, 128>}, {pipeline_mode = #tpu.pipeline_mode<synchronous>, transform_indices = @transform_4, window_bounds = array<i64: 32, 32>}, {pipeline_mode = #tpu.pipeline_mode<synchronous>, transform_indices = @transform_5, window_bounds = array<i64: 32, 32>}, {pipeline_mode = #tpu.pipeline_mode<synchronous>, transform_indices = @transform_6, window_bounds = array<i64: 4, 32>}, {transform_indices = @transform_7, window_bounds = array<i64: 1, 128, 32>}, {transform_indices = @transform_8, window_bounds = array<i64: 1, 128, 32>}]} {
    %c0 = arith.constant 0 : index
    %c0_0 = arith.constant 0 : index
    %0 = vector.load %arg7[%c0, %c0_0] : memref<4x32xf32, #tpu.memory_space<vmem>>, vector<4x32xf32>
    %1 = vector.extract_strided_slice %0 {offsets = [0, 0], sizes = [1, 32], strides = [1, 1]} : vector<4x32xf32> to vector<1x32xf32>
    %2 = vector.extract_strided_slice %0 {offsets = [1, 0], sizes = [1, 32], strides = [1, 1]} : vector<4x32xf32> to vector<1x32xf32>
    %3 = vector.extract_strided_slice %0 {offsets = [2, 0], sizes = [1, 32], strides = [1, 1]} : vector<4x32xf32> to vector<1x32xf32>
    %4 = vector.extract_strided_slice %0 {offsets = [3, 0], sizes = [1, 32], strides = [1, 1]} : vector<4x32xf32> to vector<1x32xf32>
    %c0_1 = arith.constant 0 : index
    %c0_2 = arith.constant 0 : index
    %c0_3 = arith.constant 0 : index
    %5 = vector.load %arg1[%c0_1, %c0_2, %c0_3] : memref<1x128x32xf32, #tpu.memory_space<vmem>>, vector<1x128x32xf32>
    %6 = vector.shape_cast %5 : vector<1x128x32xf32> to vector<128x32xf32>
    %cst = arith.constant dense<0.000000e+00> : vector<128xf32>
    %7 = vector.multi_reduction <add>, %6, %cst [1] : vector<128x32xf32> to vector<128xf32>
    %8 = vector.shape_cast %7 : vector<128xf32> to vector<128x1xf32>
    %cst_4 = arith.constant 3.200000e+01 : f32
    %9 = vector.broadcast %cst_4 : f32 to vector<128x1xf32>
    %10 = arith.divf %8, %9 : vector<128x1xf32>
    %11 = vector.broadcast %10 : vector<128x1xf32> to vector<128x32xf32>
    %12 = arith.subf %6, %11 : vector<128x32xf32>
    %13 = arith.mulf %12, %12 : vector<128x32xf32>
    %cst_5 = arith.constant dense<0.000000e+00> : vector<128xf32>
    %14 = vector.multi_reduction <add>, %13, %cst_5 [1] : vector<128x32xf32> to vector<128xf32>
    %15 = vector.shape_cast %14 : vector<128xf32> to vector<128x1xf32>
    %cst_6 = arith.constant 3.200000e+01 : f32
    %16 = vector.broadcast %cst_6 : f32 to vector<128x1xf32>
    %17 = arith.divf %15, %16 : vector<128x1xf32>
    %18 = vector.broadcast %10 : vector<128x1xf32> to vector<128x32xf32>
    %19 = arith.subf %6, %18 : vector<128x32xf32>
    %cst_7 = arith.constant 9.99999974E-6 : f32
    %20 = vector.broadcast %cst_7 : f32 to vector<128x1xf32>
    %21 = arith.addf %17, %20 : vector<128x1xf32>
    %22 = math.rsqrt %21 : vector<128x1xf32>
    %23 = vector.broadcast %22 : vector<128x1xf32> to vector<128x32xf32>
    %24 = arith.mulf %19, %23 : vector<128x32xf32>
    %25 = vector.broadcast %1 : vector<1x32xf32> to vector<128x32xf32>
    %26 = arith.mulf %24, %25 : vector<128x32xf32>
    %27 = vector.broadcast %2 : vector<1x32xf32> to vector<128x32xf32>
    %28 = arith.addf %26, %27 : vector<128x32xf32>
    %c0_8 = arith.constant 0 : index
    %c0_9 = arith.constant 0 : index
    %c0_10 = arith.constant 0 : index
    %29 = vector.load %arg2[%c0_8, %c0_9, %c0_10] : memref<1x128x32xf32, #tpu.memory_space<vmem>>, vector<1x128x32xf32>
    %30 = vector.shape_cast %29 : vector<1x128x32xf32> to vector<128x32xf32>
    %cst_11 = arith.constant dense<0.000000e+00> : vector<128xf32>
    %31 = vector.multi_reduction <add>, %30, %cst_11 [1] : vector<128x32xf32> to vector<128xf32>
    %32 = vector.shape_cast %31 : vector<128xf32> to vector<128x1xf32>
    %cst_12 = arith.constant 3.200000e+01 : f32
    %33 = vector.broadcast %cst_12 : f32 to vector<128x1xf32>
    %34 = arith.divf %32, %33 : vector<128x1xf32>
    %35 = vector.broadcast %34 : vector<128x1xf32> to vector<128x32xf32>
    %36 = arith.subf %30, %35 : vector<128x32xf32>
    %37 = arith.mulf %36, %36 : vector<128x32xf32>
    %cst_13 = arith.constant dense<0.000000e+00> : vector<128xf32>
    %38 = vector.multi_reduction <add>, %37, %cst_13 [1] : vector<128x32xf32> to vector<128xf32>
    %39 = vector.shape_cast %38 : vector<128xf32> to vector<128x1xf32>
    %cst_14 = arith.constant 3.200000e+01 : f32
    %40 = vector.broadcast %cst_14 : f32 to vector<128x1xf32>
    %41 = arith.divf %39, %40 : vector<128x1xf32>
    %42 = vector.broadcast %34 : vector<128x1xf32> to vector<128x32xf32>
    %43 = arith.subf %30, %42 : vector<128x32xf32>
    %cst_15 = arith.constant 9.99999974E-6 : f32
    %44 = vector.broadcast %cst_15 : f32 to vector<128x1xf32>
    %45 = arith.addf %41, %44 : vector<128x1xf32>
    %46 = math.rsqrt %45 : vector<128x1xf32>
    %47 = vector.broadcast %46 : vector<128x1xf32> to vector<128x32xf32>
    %48 = arith.mulf %43, %47 : vector<128x32xf32>
    %49 = vector.broadcast %3 : vector<1x32xf32> to vector<128x32xf32>
    %50 = arith.mulf %48, %49 : vector<128x32xf32>
    %51 = vector.broadcast %4 : vector<1x32xf32> to vector<128x32xf32>
    %52 = arith.addf %50, %51 : vector<128x32xf32>
    %53 = arith.truncf %28 : vector<128x32xf32> to vector<128x32xbf16>
    %54 = arith.truncf %52 : vector<128x32xf32> to vector<128x32xbf16>
    %cst_16 = arith.constant dense<0.000000e+00> : vector<128x128xf32>
    %55 = tpu.matmul %53, %54, %cst_16 {dimension_numbers = #tpu.dot_dimension_numbers<[1], [1], [0], [0], [0, 0, 1, 0], [], []>} : vector<128x32xbf16>, vector<128x32xbf16>, vector<128x128xf32> -> vector<128x128xf32>
    %cst_17 = arith.constant 0.176776692 : f32
    %56 = vector.broadcast %cst_17 : f32 to vector<128x128xf32>
    %57 = arith.mulf %55, %56 : vector<128x128xf32>
    %58 = tpu.iota {dimensions = array<i32: 0>} : vector<128x128xi32>
    %c8_i32 = arith.constant 8 : i32
    %c0_i32 = arith.constant 0 : i32
    %59 = arith.cmpi eq, %c8_i32, %c0_i32 : i32
    %c1_i32 = arith.constant 1 : i32
    %60 = arith.select %59, %c1_i32, %c8_i32 : i32
    %61 = vector.broadcast %60 : i32 to vector<128x128xi32>
    %62 = arith.remsi %58, %61 : vector<128x128xi32>
    %c0_i32_18 = arith.constant 0 : i32
    %63 = vector.broadcast %c0_i32_18 : i32 to vector<128x128xi32>
    %64 = arith.cmpi ne, %62, %63 : vector<128x128xi32>
    %c0_i32_19 = arith.constant 0 : i32
    %65 = vector.broadcast %c0_i32_19 : i32 to vector<128x128xi32>
    %66 = arith.cmpi slt, %62, %65 : vector<128x128xi32>
    %c0_i32_20 = arith.constant 0 : i32
    %67 = arith.cmpi slt, %60, %c0_i32_20 : i32
    %68 = vector.broadcast %67 : i1 to vector<128x128xi1>
    %69 = vector.broadcast %68 : vector<128x128xi1> to vector<128x128xi1>
    %70 = arith.xori %66, %69 : vector<128x128xi1>
    %71 = arith.andi %70, %64 : vector<128x128xi1>
    %72 = vector.broadcast %60 : i32 to vector<128x128xi32>
    %73 = arith.addi %62, %72 : vector<128x128xi32>
    %74 = arith.select %71, %73, %62 : vector<128x128xi1>, vector<128x128xi32>
    %75 = tpu.iota {dimensions = array<i32: 1>} : vector<128x128xi32>
    %c8_i32_21 = arith.constant 8 : i32
    %c0_i32_22 = arith.constant 0 : i32
    %76 = arith.cmpi eq, %c8_i32_21, %c0_i32_22 : i32
    %c1_i32_23 = arith.constant 1 : i32
    %77 = arith.select %76, %c1_i32_23, %c8_i32_21 : i32
    %78 = vector.broadcast %77 : i32 to vector<128x128xi32>
    %79 = arith.remsi %75, %78 : vector<128x128xi32>
    %c0_i32_24 = arith.constant 0 : i32
    %80 = vector.broadcast %c0_i32_24 : i32 to vector<128x128xi32>
    %81 = arith.cmpi ne, %79, %80 : vector<128x128xi32>
    %c0_i32_25 = arith.constant 0 : i32
    %82 = vector.broadcast %c0_i32_25 : i32 to vector<128x128xi32>
    %83 = arith.cmpi slt, %79, %82 : vector<128x128xi32>
    %c0_i32_26 = arith.constant 0 : i32
    %84 = arith.cmpi slt, %77, %c0_i32_26 : i32
    %85 = vector.broadcast %84 : i1 to vector<128x128xi1>
    %86 = vector.broadcast %85 : vector<128x128xi1> to vector<128x128xi1>
    %87 = arith.xori %83, %86 : vector<128x128xi1>
    %88 = arith.andi %87, %81 : vector<128x128xi1>
    %89 = vector.broadcast %77 : i32 to vector<128x128xi32>
    %90 = arith.addi %79, %89 : vector<128x128xi32>
    %91 = arith.select %88, %90, %79 : vector<128x128xi1>, vector<128x128xi32>
    %92 = arith.cmpi eq, %74, %91 : vector<128x128xi32>
    %cst_27 = arith.constant -1.000000e+30 : f32
    %93 = vector.broadcast %cst_27 : f32 to vector<128x128xf32>
    %94 = arith.select %92, %57, %93 : vector<128x128xi1>, vector<128x128xf32>
    %cst_28 = arith.constant dense<0xFF800000> : vector<128xf32>
    %95 = vector.multi_reduction <maximumf>, %94, %cst_28 [1] : vector<128x128xf32> to vector<128xf32>
    %96 = vector.shape_cast %95 : vector<128xf32> to vector<128x1xf32>
    %97 = vector.broadcast %96 : vector<128x1xf32> to vector<128x128xf32>
    %98 = arith.subf %94, %97 : vector<128x128xf32>
    %99 = math.exp %98 : vector<128x128xf32>
    %cst_29 = arith.constant dense<0.000000e+00> : vector<128xf32>
    %100 = vector.multi_reduction <add>, %99, %cst_29 [1] : vector<128x128xf32> to vector<128xf32>
    %101 = vector.shape_cast %100 : vector<128xf32> to vector<128x1xf32>
    %102 = vector.broadcast %101 : vector<128x1xf32> to vector<128x128xf32>
    %103 = arith.divf %99, %102 : vector<128x128xf32>
    %c0_30 = arith.constant 0 : index
    %c0_31 = arith.constant 0 : index
    %104 = vector.load %arg3[%c0_30, %c0_31] : memref<128x128xf32, #tpu.memory_space<vmem>>, vector<128x128xf32>
    %105 = arith.mulf %104, %103 : vector<128x128xf32>
    %106 = arith.truncf %105 : vector<128x128xf32> to vector<128x128xbf16>
    %c0_32 = arith.constant 0 : index
    %c0_33 = arith.constant 0 : index
    %107 = vector.load %arg4[%c0_32, %c0_33] : memref<128x128xf32, #tpu.memory_space<vmem>>, vector<128x128xf32>
    %108 = arith.mulf %107, %103 : vector<128x128xf32>
    %109 = arith.truncf %108 : vector<128x128xf32> to vector<128x128xbf16>
    %cst_34 = arith.constant dense<0.000000e+00> : vector<128x32xf32>
    %110 = tpu.matmul %106, %54, %cst_34 {dimension_numbers = #tpu.dot_dimension_numbers<[1], [0], [0], [1], [0, 0, 1, 1], [], []>} : vector<128x128xbf16>, vector<128x32xbf16>, vector<128x32xf32> -> vector<128x32xf32>
    %cst_35 = arith.constant dense<0.000000e+00> : vector<128x32xf32>
    %111 = tpu.matmul %109, %53, %cst_35 {dimension_numbers = #tpu.dot_dimension_numbers<[0], [0], [1], [1], [0, 1, 1, 1], [], []>} : vector<128x128xbf16>, vector<128x32xbf16>, vector<128x32xf32> -> vector<128x32xf32>
    %112 = arith.truncf %110 : vector<128x32xf32> to vector<128x32xbf16>
    %c0_36 = arith.constant 0 : index
    %c0_37 = arith.constant 0 : index
    %113 = vector.load %arg5[%c0_36, %c0_37] : memref<32x32xbf16, #tpu.memory_space<vmem>>, vector<32x32xbf16>
    %cst_38 = arith.constant dense<0.000000e+00> : vector<128x32xf32>
    %114 = tpu.matmul %112, %113, %cst_38 {dimension_numbers = #tpu.dot_dimension_numbers<[1], [0], [0], [1], [0, 0, 1, 1], [], []>} : vector<128x32xbf16>, vector<32x32xbf16>, vector<128x32xf32> -> vector<128x32xf32>
    %cst_39 = arith.constant 0.000000e+00 : f32
    %115 = vector.broadcast %cst_39 : f32 to vector<128x32xf32>
    %116 = arith.maximumf %114, %115 : vector<128x32xf32>
    %117 = arith.truncf %111 : vector<128x32xf32> to vector<128x32xbf16>
    %c0_40 = arith.constant 0 : index
    %c0_41 = arith.constant 0 : index
    %118 = vector.load %arg6[%c0_40, %c0_41] : memref<32x32xbf16, #tpu.memory_space<vmem>>, vector<32x32xbf16>
    %cst_42 = arith.constant dense<0.000000e+00> : vector<128x32xf32>
    %119 = tpu.matmul %117, %118, %cst_42 {dimension_numbers = #tpu.dot_dimension_numbers<[1], [0], [0], [1], [0, 0, 1, 1], [], []>} : vector<128x32xbf16>, vector<32x32xbf16>, vector<128x32xf32> -> vector<128x32xf32>
    %cst_43 = arith.constant 0.000000e+00 : f32
    %120 = vector.broadcast %cst_43 : f32 to vector<128x32xf32>
    %121 = arith.maximumf %119, %120 : vector<128x32xf32>
    %c0_44 = arith.constant 0 : index
    %c0_45 = arith.constant 0 : index
    %c0_46 = arith.constant 0 : index
    %122 = vector.load %arg1[%c0_44, %c0_45, %c0_46] : memref<1x128x32xf32, #tpu.memory_space<vmem>>, vector<1x128x32xf32>
    %123 = vector.shape_cast %122 : vector<1x128x32xf32> to vector<128x32xf32>
    %124 = arith.addf %123, %116 : vector<128x32xf32>
    %c0_47 = arith.constant 0 : index
    %c0_48 = arith.constant 0 : index
    %c0_49 = arith.constant 0 : index
    %125 = vector.load %arg8[%c0_47, %c0_48, %c0_49] : memref<1x128x32xf32, #tpu.memory_space<vmem>>, vector<1x128x32xf32>
    %126 = vector.shape_cast %125 : vector<1x128x32xf32> to vector<128x32xf32>
    %127 = vector.shape_cast %124 : vector<128x32xf32> to vector<1x128x32xf32>
    tpu.vector_store %arg8[%c0_47, %c0_48, %c0_49], %127 {strides = array<i32>} : memref<1x128x32xf32, #tpu.memory_space<vmem>>, vector<1x128x32xf32>,
    %c0_50 = arith.constant 0 : index
    %c0_51 = arith.constant 0 : index
    %c0_52 = arith.constant 0 : index
    %128 = vector.load %arg2[%c0_50, %c0_51, %c0_52] : memref<1x128x32xf32, #tpu.memory_space<vmem>>, vector<1x128x32xf32>
    %129 = vector.shape_cast %128 : vector<1x128x32xf32> to vector<128x32xf32>
    %130 = arith.addf %129, %121 : vector<128x32xf32>
    %c0_53 = arith.constant 0 : index
    %c0_54 = arith.constant 0 : index
    %c0_55 = arith.constant 0 : index
    %131 = vector.load %arg9[%c0_53, %c0_54, %c0_55] : memref<1x128x32xf32, #tpu.memory_space<vmem>>, vector<1x128x32xf32>
    %132 = vector.shape_cast %131 : vector<1x128x32xf32> to vector<128x32xf32>
    %133 = vector.shape_cast %130 : vector<128x32xf32> to vector<1x128x32xf32>
    tpu.vector_store %arg9[%c0_53, %c0_54, %c0_55], %133 {strides = array<i32>} : memref<1x128x32xf32, #tpu.memory_space<vmem>>, vector<1x128x32xf32>,
    return
  }
  func.func @transform_0(%arg0: i32) -> (i32, i32, i32) {
    %c0_i32 = arith.constant 0 : i32
    %c0_i32_0 = arith.constant 0 : i32
    %c0_i32_1 = arith.constant 0 : i32
    return %arg0, %c0_i32, %c0_i32_0 : i32, i32, i32
  }
  func.func @transform_1(%arg0: i32) -> (i32, i32, i32) {
    %c0_i32 = arith.constant 0 : i32
    %c0_i32_0 = arith.constant 0 : i32
    %c0_i32_1 = arith.constant 0 : i32
    return %arg0, %c0_i32, %c0_i32_0 : i32, i32, i32
  }
  func.func @transform_2(%arg0: i32) -> (i32, i32) {
    %c0_i32 = arith.constant 0 : i32
    %c0_i32_0 = arith.constant 0 : i32
    %c0_i32_1 = arith.constant 0 : i32
    return %c0_i32, %c0_i32_0 : i32, i32
  }
  func.func @transform_3(%arg0: i32) -> (i32, i32) {
    %c0_i32 = arith.constant 0 : i32
    %c0_i32_0 = arith.constant 0 : i32
    %c0_i32_1 = arith.constant 0 : i32
    return %c0_i32, %c0_i32_0 : i32, i32
  }
  func.func @transform_4(%arg0: i32) -> (i32, i32) {
    %c0_i32 = arith.constant 0 : i32
    %c0_i32_0 = arith.constant 0 : i32
    %c0_i32_1 = arith.constant 0 : i32
    return %c0_i32, %c0_i32_0 : i32, i32
  }
  func.func @transform_5(%arg0: i32) -> (i32, i32) {
    %c0_i32 = arith.constant 0 : i32
    %c0_i32_0 = arith.constant 0 : i32
    %c0_i32_1 = arith.constant 0 : i32
    return %c0_i32, %c0_i32_0 : i32, i32
  }
  func.func @transform_6(%arg0: i32) -> (i32, i32) {
    %c0_i32 = arith.constant 0 : i32
    %c0_i32_0 = arith.constant 0 : i32
    %c0_i32_1 = arith.constant 0 : i32
    return %c0_i32, %c0_i32_0 : i32, i32
  }
  func.func @transform_7(%arg0: i32) -> (i32, i32, i32) {
    %c0_i32 = arith.constant 0 : i32
    %c0_i32_0 = arith.constant 0 : i32
    %c0_i32_1 = arith.constant 0 : i32
    return %arg0, %c0_i32, %c0_i32_0 : i32, i32, i32
  }
  func.func @transform_8(%arg0: i32) -> (i32, i32, i32) {
    %c0_i32 = arith.constant 0 : i32
    %c0_i32_0 = arith.constant 0 : i32
    %c0_i32_1 = arith.constant 0 : i32
    return %arg0, %c0_i32, %c0_i32_0 : i32, i32, i32
  }
}

</mosaic_0001>

<llo_original>
// kernel: tpu_custom_call.1
$region0: #{tpu_custom_call.1}
  #allocation0 [shape = 'u32[]', space=smem, size = 0x4, offset = 0x4, fixed_abs, tag = 'smem constant byte address 0x4 - core index']
  #allocation1 [shape = 'u32[72,128]{1,0:T(1,128)}', space=vmem, size = 0x9000, scoped, tag = 'internal scratch']
  %s0 = inlined_call_operand.vmem [shape: f32[2,128,32], index: 0, kind: input, shape index: {}]
  %s1 = inlined_call_operand.vmem [shape: f32[2,128,32], index: 1, kind: input, shape index: {}]
  %s2 = inlined_call_operand.vmem [shape: f32[128,128], index: 2, kind: input, shape index: {}]
  %s3 = inlined_call_operand.vmem [shape: f32[128,128], index: 3, kind: input, shape index: {}]
  %s4 = inlined_call_operand.vmem [shape: bf16[32,32], index: 4, kind: input, shape index: {}]
  %s5 = inlined_call_operand.vmem [shape: bf16[32,32], index: 5, kind: input, shape index: {}]
  %s6 = inlined_call_operand.vmem [shape: f32[4,32], index: 6, kind: input, shape index: {}]
  %s7 = inlined_call_operand.vmem [shape: f32[2,128,32], index: 7, kind: output, shape index: {0}]
  %s8 = inlined_call_operand.vmem [shape: f32[2,128,32], index: 8, kind: output, shape index: {1}]
  %9 = xla_tuple %s7, %s8
  %s10 = sld [smem:[#allocation0]]
  $region69: #{tpu_custom_call.1} parent=0
    _
  %s12 = ssub.s32 1, %s10
  %s13 = scalar_select 0, %s12, %s10
  loop: start=0, step=1, limit=4
  $region2: #{tpu_custom_call.1} parent=0 // loop_pre_header
    _
  $region3: #{tpu_custom_call.1} parent=0 // loop_header
    %s15 = sphi 0, %s19
    %p16 = scmp.ge.s32.totalorder %s15, 4
    %s25 = sphi 0, %s27
    %s28 = sphi 0, %s25
    %s29 = sphi 0, %s28
    %s45 = sphi 0, %s29
    %s51 = sphi 0, %s53
    %s54 = sphi 0, %s51
    %s55 = sphi 0, %s54
    %s71 = sphi 0, %s55
    %s75 = sphi 0, %s75
    %s77 = sphi 0, %s75
    %s78 = sphi 0, %s77
    %s92 = sphi 0, %s78
    %s96 = sphi 0, %s96
    %s98 = sphi 0, %s96
    %s99 = sphi 0, %s98
    %s113 = sphi 0, %s99
    %s117 = sphi 0, %s117
    %s119 = sphi 0, %s117
    %s120 = sphi 0, %s119
    %s134 = sphi 0, %s120
    %s138 = sphi 0, %s138
    %s140 = sphi 0, %s138
    %s141 = sphi 0, %s140
    %s155 = sphi 0, %s141
    %s159 = sphi 0, %s159
    %s161 = sphi 0, %s159
    %s162 = sphi 0, %s161
    %s176 = sphi 0, %s162
    %s182 = sphi 0, %s184
    %s185 = sphi 0, %s182
    %s186 = sphi 0, %s185
    %s202 = sphi 0, %s186
    %s208 = sphi 0, %s210
    %s211 = sphi 0, %s208
    %s212 = sphi 0, %s211
    %s228 = sphi 0, %s212
  $region4: #{tpu_custom_call.1} parent=0 // loop_header_branch
    %18 = sbr.rel (%p16) target = $region8
  $region5: #{tpu_custom_call.1} parent=0 // loop_body
    %s20 = ssub.s32 %s15, 1
    %s21 = ssub.s32 %s15, 2
    %s22 = sadd.s32 %s15, 1
    %s23 = ssub.s32 %s15, %s22
    %p24 = scmp.eq.s32.totalorder %s23, 0
    %s26 = sadd.s32 %s25, 1
    %s27 = scalar_select %p24, %s25, %s26
    %p30 = pneg %p24
    %p31 = scmp.eq.s32.totalorder %s15, 1
    %p32 = por %p30, %p31
    %p33 = scmp.ne.s32.totalorder %s25, %s28
    %p34 = scmp.eq.s32.totalorder %s15, 0
    %p35 = por %p33, %p34
    %p36 = scmp.ne.s32.totalorder %s25, %s28
    %p37 = scmp.eq.s32.totalorder %s20, 1
    %p38 = por %p36, %p37
    %p39 = scmp.ne.s32.totalorder %s28, %s29
    %p40 = scmp.eq.s32.totalorder %s20, 0
    %p41 = por %p39, %p40
    %p42 = scmp.ne.s32.totalorder %s28, %s29
    %p43 = scmp.eq.s32.totalorder %s21, 1
    %p44 = por %p42, %p43
    %p46 = scmp.ne.s32.totalorder %s29, %s45
    %p47 = scmp.eq.s32.totalorder %s21, 0
    %p48 = por %p46, %p47
    %s49 = ssub.s32 %s15, %s22
    %p50 = scmp.eq.s32.totalorder %s49, 0
    %s52 = sadd.s32 %s51, 1
    %s53 = scalar_select %p50, %s51, %s52
    %p56 = pneg %p50
    %p57 = scmp.eq.s32.totalorder %s15, 1
    %p58 = por %p56, %p57
    %p59 = scmp.ne.s32.totalorder %s51, %s54
    %p60 = scmp.eq.s32.totalorder %s15, 0
    %p61 = por %p59, %p60
    %p62 = scmp.ne.s32.totalorder %s51, %s54
    %p63 = scmp.eq.s32.totalorder %s20, 1
    %p64 = por %p62, %p63
    %p65 = scmp.ne.s32.totalorder %s54, %s55
    %p66 = scmp.eq.s32.totalorder %s20, 0
    %p67 = por %p65, %p66
    %p68 = scmp.ne.s32.totalorder %s54, %s55
    %p69 = scmp.eq.s32.totalorder %s21, 1
    %p70 = por %p68, %p69
    %p72 = scmp.ne.s32.totalorder %s55, %s71
    %p73 = scmp.eq.s32.totalorder %s21, 0
    %p74 = por %p72, %p73
    %s76 = sadd.s32 %s75, 1
    %p79 = scmp.eq.s32.totalorder %s15, 1
    %p80 = scmp.ne.s32.totalorder %s75, %s77
    %p81 = scmp.eq.s32.totalorder %s15, 0
    %p82 = por %p80, %p81
    %p83 = scmp.ne.s32.totalorder %s75, %s77
    %p84 = scmp.eq.s32.totalorder %s20, 1
    %p85 = por %p83, %p84
    %p86 = scmp.ne.s32.totalorder %s77, %s78
    %p87 = scmp.eq.s32.totalorder %s20, 0
    %p88 = por %p86, %p87
    %p89 = scmp.ne.s32.totalorder %s77, %s78
    %p90 = scmp.eq.s32.totalorder %s21, 1
    %p91 = por %p89, %p90
    %p93 = scmp.ne.s32.totalorder %s78, %s92
    %p94 = scmp.eq.s32.totalorder %s21, 0
    %p95 = por %p93, %p94
    %s97 = sadd.s32 %s96, 1
    %p100 = scmp.eq.s32.totalorder %s15, 1
    %p101 = scmp.ne.s32.totalorder %s96, %s98
    %p102 = scmp.eq.s32.totalorder %s15, 0
    %p103 = por %p101, %p102
    %p104 = scmp.ne.s32.totalorder %s96, %s98
    %p105 = scmp.eq.s32.totalorder %s20, 1
    %p106 = por %p104, %p105
    %p107 = scmp.ne.s32.totalorder %s98, %s99
    %p108 = scmp.eq.s32.totalorder %s20, 0
    %p109 = por %p107, %p108
    %p110 = scmp.ne.s32.totalorder %s98, %s99
    %p111 = scmp.eq.s32.totalorder %s21, 1
    %p112 = por %p110, %p111
    %p114 = scmp.ne.s32.totalorder %s99, %s113
    %p115 = scmp.eq.s32.totalorder %s21, 0
    %p116 = por %p114, %p115
    %s118 = sadd.s32 %s117, 1
    %p121 = scmp.eq.s32.totalorder %s15, 1
    %p122 = scmp.ne.s32.totalorder %s117, %s119
    %p123 = scmp.eq.s32.totalorder %s15, 0
    %p124 = por %p122, %p123
    %p125 = scmp.ne.s32.totalorder %s117, %s119
    %p126 = scmp.eq.s32.totalorder %s20, 1
    %p127 = por %p125, %p126
    %p128 = scmp.ne.s32.totalorder %s119, %s120
    %p129 = scmp.eq.s32.totalorder %s20, 0
    %p130 = por %p128, %p129
    %p131 = scmp.ne.s32.totalorder %s119, %s120
    %p132 = scmp.eq.s32.totalorder %s21, 1
    %p133 = por %p131, %p132
    %p135 = scmp.ne.s32.totalorder %s120, %s134
    %p136 = scmp.eq.s32.totalorder %s21, 0
    %p137 = por %p135, %p136
    %s139 = sadd.s32 %s138, 1
    %p142 = scmp.eq.s32.totalorder %s15, 1
    %p143 = scmp.ne.s32.totalorder %s138, %s140
    %p144 = scmp.eq.s32.totalorder %s15, 0
    %p145 = por %p143, %p144
    %p146 = scmp.ne.s32.totalorder %s138, %s140
    %p147 = scmp.eq.s32.totalorder %s20, 1
    %p148 = por %p146, %p147
    %p149 = scmp.ne.s32.totalorder %s140, %s141
    %p150 = scmp.eq.s32.totalorder %s20, 0
    %p151 = por %p149, %p150
    %p152 = scmp.ne.s32.totalorder %s140, %s141
    %p153 = scmp.eq.s32.totalorder %s21, 1
    %p154 = por %p152, %p153
    %p156 = scmp.ne.s32.totalorder %s141, %s155
    %p157 = scmp.eq.s32.totalorder %s21, 0
    %p158 = por %p156, %p157
    %s160 = sadd.s32 %s159, 1
    %p163 = scmp.eq.s32.totalorder %s15, 1
    %p164 = scmp.ne.s32.totalorder %s159, %s161
    %p165 = scmp.eq.s32.totalorder %s15, 0
    %p166 = por %p164, %p165
    %p167 = scmp.ne.s32.totalorder %s159, %s161
    %p168 = scmp.eq.s32.totalorder %s20, 1
    %p169 = por %p167, %p168
    %p170 = scmp.ne.s32.totalorder %s161, %s162
    %p171 = scmp.eq.s32.totalorder %s20, 0
    %p172 = por %p170, %p171
    %p173 = scmp.ne.s32.totalorder %s161, %s162
    %p174 = scmp.eq.s32.totalorder %s21, 1
    %p175 = por %p173, %p174
    %p177 = scmp.ne.s32.totalorder %s162, %s176
    %p178 = scmp.eq.s32.totalorder %s21, 0
    %p179 = por %p177, %p178
    %s180 = ssub.s32 %s15, %s22
    %p181 = scmp.eq.s32.totalorder %s180, 0
    %s183 = sadd.s32 %s182, 1
    %s184 = scalar_select %p181, %s182, %s183
    %p187 = pneg %p181
    %p188 = scmp.eq.s32.totalorder %s15, 1
    %p189 = por %p187, %p188
    %p190 = scmp.ne.s32.totalorder %s182, %s185
    %p191 = scmp.eq.s32.totalorder %s15, 0
    %p192 = por %p190, %p191
    %p193 = scmp.ne.s32.totalorder %s182, %s185
    %p194 = scmp.eq.s32.totalorder %s20, 1
    %p195 = por %p193, %p194
    %p196 = scmp.ne.s32.totalorder %s185, %s186
    %p197 = scmp.eq.s32.totalorder %s20, 0
    %p198 = por %p196, %p197
    %p199 = scmp.ne.s32.totalorder %s185, %s186
    %p200 = scmp.eq.s32.totalorder %s21, 1
    %p201 = por %p199, %p200
    %p203 = scmp.ne.s32.totalorder %s186, %s202
    %p204 = scmp.eq.s32.totalorder %s21, 0
    %p205 = por %p203, %p204
    %s206 = ssub.s32 %s15, %s22
    %p207 = scmp.eq.s32.totalorder %s206, 0
    %s209 = sadd.s32 %s208, 1
    %s210 = scalar_select %p207, %s208, %s209
    %p213 = pneg %p207
    %p214 = scmp.eq.s32.totalorder %s15, 1
    %p215 = por %p213, %p214
    %p216 = scmp.ne.s32.totalorder %s208, %s211
    %p217 = scmp.eq.s32.totalorder %s15, 0
    %p218 = por %p216, %p217
    %p219 = scmp.ne.s32.totalorder %s208, %s211
    %p220 = scmp.eq.s32.totalorder %s20, 1
    %p221 = por %p219, %p220
    %p222 = scmp.ne.s32.totalorder %s211, %s212
    %p223 = scmp.eq.s32.totalorder %s20, 0
    %p224 = por %p222, %p223
    %p225 = scmp.ne.s32.totalorder %s211, %s212
    %p226 = scmp.eq.s32.totalorder %s21, 1
    %p227 = por %p225, %p226
    %p229 = scmp.ne.s32.totalorder %s212, %s228
    %p230 = scmp.eq.s32.totalorder %s21, 0
    %p231 = por %p229, %p230
    %p232 = scmp.le.s32.totalorder 1, %s15
    %p233 = scmp.lt.s32.totalorder %s15, 3
    %p234 = pnand %p232, %p233
    %p235 = pneg %p234
    // Predicated region
    $region9: #{tpu_custom_call.1} parent=5 // pred_check
      _
    $region10: #{tpu_custom_call.1} parent=5 // pred_check_branch
      %237 = sbr.rel (%p234) target = $region12
    $region11: #{tpu_custom_call.1} parent=5 // pred_region
      %s238 = ssub.s32 %s15, 1
      // Predicated region
      $region13: #{tpu_custom_call.1} parent=11 // pred_check
        %p239 = pneg %p88
      $region14: #{tpu_custom_call.1} parent=11 // pred_check_branch
        %241 = sbr.rel (%p239) target = $region16
      $region15: #{tpu_custom_call.1} parent=11 // pred_region
        _
      $region16: #{tpu_custom_call.1} parent=11 // pred_fallthru
        _
      // Predicated region
      $region17: #{tpu_custom_call.1} parent=11 // pred_check
        %p242 = pneg %p109
      $region18: #{tpu_custom_call.1} parent=11 // pred_check_branch
        %244 = sbr.rel (%p242) target = $region20
      $region19: #{tpu_custom_call.1} parent=11 // pred_region
        _
      $region20: #{tpu_custom_call.1} parent=11 // pred_fallthru
        _
      // Predicated region
      $region21: #{tpu_custom_call.1} parent=11 // pred_check
        %p245 = pneg %p130
      $region22: #{tpu_custom_call.1} parent=11 // pred_check_branch
        %247 = sbr.rel (%p245) target = $region24
      $region23: #{tpu_custom_call.1} parent=11 // pred_region
        _
      $region24: #{tpu_custom_call.1} parent=11 // pred_fallthru
        _
      // Predicated region
      $region25: #{tpu_custom_call.1} parent=11 // pred_check
        %p248 = pneg %p151
      $region26: #{tpu_custom_call.1} parent=11 // pred_check_branch
        %250 = sbr.rel (%p248) target = $region28
      $region27: #{tpu_custom_call.1} parent=11 // pred_region
        _
      $region28: #{tpu_custom_call.1} parent=11 // pred_fallthru
        _
      // Predicated region
      $region29: #{tpu_custom_call.1} parent=11 // pred_check
        %p251 = pneg %p172
      $region30: #{tpu_custom_call.1} parent=11 // pred_check_branch
        %253 = sbr.rel (%p251) target = $region32
      $region31: #{tpu_custom_call.1} parent=11 // pred_region
        _
      $region32: #{tpu_custom_call.1} parent=11 // pred_fallthru
        _
    $region12: #{tpu_custom_call.1} parent=5 // pred_fallthru
      _
    %p254 = scmp.lt.s32.totalorder %s15, 2
    // Predicated region
    $region33: #{tpu_custom_call.1} parent=5 // pred_check
      %p255 = pneg %p254
    $region34: #{tpu_custom_call.1} parent=5 // pred_check_branch
      %257 = sbr.rel (%p255) target = $region36
    $region35: #{tpu_custom_call.1} parent=5 // pred_region
      // Predicated region
      $region37: #{tpu_custom_call.1} parent=35 // pred_check
        %p258 = pneg %p35
      $region38: #{tpu_custom_call.1} parent=35 // pred_check_branch
        %260 = sbr.rel (%p258) target = $region40
      $region39: #{tpu_custom_call.1} parent=35 // pred_region
        %p261 = scmp.lt.s32.totalorder %s15, 1
        %s262 = scalar_select %p261, %s15, 1
        %s263 = smul.addr %s262, 16
        %s264 = smul.addr %s263, 8
        %s265 = scalar_lea.vmem %s0, %s264
      $region40: #{tpu_custom_call.1} parent=35 // pred_fallthru
        _
      // Predicated region
      $region41: #{tpu_custom_call.1} parent=35 // pred_check
        %p266 = pneg %p61
      $region42: #{tpu_custom_call.1} parent=35 // pred_check_branch
        %268 = sbr.rel (%p266) target = $region44
      $region43: #{tpu_custom_call.1} parent=35 // pred_region
        %p269 = scmp.lt.s32.totalorder %s15, 1
        %s270 = scalar_select %p269, %s15, 1
        %s271 = smul.addr %s270, 16
        %s272 = smul.addr %s271, 8
        %s273 = scalar_lea.vmem %s1, %s272
      $region44: #{tpu_custom_call.1} parent=35 // pred_fallthru
        _
    $region36: #{tpu_custom_call.1} parent=5 // pred_fallthru
      _
    %p274 = scmp.le.s32.totalorder 1, %s15
    %p275 = scmp.lt.s32.totalorder %s15, 3
    %p276 = pnand %p274, %p275
    %p277 = pneg %p276
    // Predicated region
    $region45: #{tpu_custom_call.1} parent=5 // pred_check
      _
    $region46: #{tpu_custom_call.1} parent=5 // pred_check_branch
      %279 = sbr.rel (%p276) target = $region48
    $region47: #{tpu_custom_call.1} parent=5 // pred_region
      %s280 = ssub.s32 %s15, 1
      %p281 = scmp.lt.s32.totalorder %s20, 1
      %s282 = scalar_select %p281, %s20, 1
      %s283 = smul.addr %s282, 16
      %s284 = smul.addr %s283, 8
      %s285 = scalar_lea.vmem %s0, %s284
      %p286 = pneg %p41
      %p287 = pneg %p38
      %p288 = scmp.lt.s32.totalorder %s20, 1
      %s289 = scalar_select %p288, %s20, 1
      %s290 = smul.addr %s289, 16
      %s291 = smul.addr %s290, 8
      %s292 = scalar_lea.vmem %s1, %s291
      %p293 = pneg %p67
      %p294 = pneg %p64
      %p295 = pneg %p88
      %p296 = pneg %p85
      %p297 = pneg %p109
      %p298 = pneg %p106
      %p299 = pneg %p130
      %p300 = pneg %p127
      %p301 = pneg %p151
      %p302 = pneg %p148
      %p303 = pneg %p172
      %p304 = pneg %p169
      %p305 = pneg %p198
      %p306 = pneg %p195
      %p307 = scmp.lt.s32.totalorder %s20, 1
      %s308 = scalar_select %p307, %s20, 1
      %s309 = smul.addr %s308, 16
      %s310 = smul.addr %s309, 8
      %s311 = scalar_lea.vmem %s7, %s310
      %p312 = pneg %p224
      %p313 = pneg %p221
      %p314 = scmp.lt.s32.totalorder %s20, 1
      %s315 = scalar_select %p314, %s20, 1
      %s316 = smul.addr %s315, 16
      %s317 = smul.addr %s316, 8
      %s318 = scalar_lea.vmem %s8, %s317
      %p319 = scmp.lt.s32.totalorder %s20, 1
      %s320 = scalar_select %p319, %s20, 1
      %s321 = smul.addr %s320, 16
      %s322 = smul.addr %s321, 8
      %s323 = scalar_lea.vmem %s0, %s322
      %p324 = scmp.lt.s32.totalorder %s20, 1
      %s325 = scalar_select %p324, %s20, 1
      %s326 = smul.addr %s325, 16
      %s327 = smul.addr %s326, 8
      %s328 = scalar_lea.vmem %s1, %s327
      %p329 = scmp.lt.s32.totalorder %s20, 1
      %s330 = scalar_select %p329, %s20, 1
      %s331 = smul.addr %s330, 16
      %s332 = smul.addr %s331, 8
      %s333 = scalar_lea.vmem %s7, %s332
      %p334 = scmp.lt.s32.totalorder %s20, 1
      %s335 = scalar_select %p334, %s20, 1
      %s336 = smul.addr %s335, 16
      %s337 = smul.addr %s336, 8
      %s338 = scalar_lea.vmem %s8, %s337
      %v340 = vld [vmem:[%s6] sm:$0xf]
      %v341 = vld [vmem:[%s323] sm:$0xff]
      %v342 = vld [vmem:[%s323 + $0x8] sm:$0xff]
      %v343 = vld [vmem:[%s323 + $0x10] sm:$0xff]
      %v344 = vld [vmem:[%s323 + $0x18] sm:$0xff]
      %v345 = vld [vmem:[%s323 + $0x20] sm:$0xff]
      %v346 = vld [vmem:[%s323 + $0x28] sm:$0xff]
      %v347 = vld [vmem:[%s323 + $0x30] sm:$0xff]
      %v348 = vld [vmem:[%s323 + $0x38] sm:$0xff]
      %v349 = vld [vmem:[%s323 + $0x40] sm:$0xff]
      %v350 = vld [vmem:[%s323 + $0x48] sm:$0xff]
      %v351 = vld [vmem:[%s323 + $0x50] sm:$0xff]
      %v352 = vld [vmem:[%s323 + $0x58] sm:$0xff]
      %v353 = vld [vmem:[%s323 + $0x60] sm:$0xff]
      %v354 = vld [vmem:[%s323 + $0x68] sm:$0xff]
      %v355 = vld [vmem:[%s323 + $0x70] sm:$0xff]
      %v356 = vld [vmem:[%s323 + $0x78] sm:$0xff]
      %vm357 = vcmask 261120
      %v358 = vsel %vm357, %v341, 0.0
      %359 = vadd.xlane.f32.xlu0 %v358
      %v360 = vpop.xlane.xlu0 %359
      %v361 = vsel %vm357, %v342, 0.0
      %362 = vadd.xlane.f32.xlu0 %v361
      %v363 = vpop.xlane.xlu0 %362
      %v364 = vsel %vm357, %v343, 0.0
      %365 = vadd.xlane.f32.xlu0 %v364
      %v366 = vpop.xlane.xlu0 %365
      %v367 = vsel %vm357, %v344, 0.0
      %368 = vadd.xlane.f32.xlu0 %v367
      %v369 = vpop.xlane.xlu0 %368
      %v370 = vsel %vm357, %v345, 0.0
      %371 = vadd.xlane.f32.xlu0 %v370
      %v372 = vpop.xlane.xlu0 %371
      %v373 = vsel %vm357, %v346, 0.0
      %374 = vadd.xlane.f32.xlu0 %v373
      %v375 = vpop.xlane.xlu0 %374
      %v376 = vsel %vm357, %v347, 0.0
      %377 = vadd.xlane.f32.xlu0 %v376
      %v378 = vpop.xlane.xlu0 %377
      %v379 = vsel %vm357, %v348, 0.0
      %380 = vadd.xlane.f32.xlu0 %v379
      %v381 = vpop.xlane.xlu0 %380
      %v382 = vsel %vm357, %v349, 0.0
      %383 = vadd.xlane.f32.xlu0 %v382
      %v384 = vpop.xlane.xlu0 %383
      %v385 = vsel %vm357, %v350, 0.0
      %386 = vadd.xlane.f32.xlu0 %v385
      %v387 = vpop.xlane.xlu0 %386
      %v388 = vsel %vm357, %v351, 0.0
      %389 = vadd.xlane.f32.xlu0 %v388
      %v390 = vpop.xlane.xlu0 %389
      %v391 = vsel %vm357, %v352, 0.0
      %392 = vadd.xlane.f32.xlu0 %v391
      %v393 = vpop.xlane.xlu0 %392
      %v394 = vsel %vm357, %v353, 0.0
      %395 = vadd.xlane.f32.xlu0 %v394
      %v396 = vpop.xlane.xlu0 %395
      %v397 = vsel %vm357, %v354, 0.0
      %398 = vadd.xlane.f32.xlu0 %v397
      %v399 = vpop.xlane.xlu0 %398
      %v400 = vsel %vm357, %v355, 0.0
      %401 = vadd.xlane.f32.xlu0 %v400
      %v402 = vpop.xlane.xlu0 %401
      %v403 = vsel %vm357, %v356, 0.0
      %404 = vadd.xlane.f32.xlu0 %v403
      %v405 = vpop.xlane.xlu0 %404
      %v406 = vrcp.pop 32.0
      %v407 = vmul.f32 32.0, %v406
      %v408 = vsub.f32 1.0, %v407
      %v409 = vmul.f32 %v406, %v408
      %v410 = vadd.f32 %v406, %v409
      %vm411 = vweird.f32 %v406
      %v412 = vsel %vm411, %v406, %v410
      %v413 = vmul.f32 %v360, %v412
      %v414 = vmul.f32 %v363, %v412
      %v415 = vmul.f32 %v366, %v412
      %v416 = vmul.f32 %v369, %v412
      %v417 = vmul.f32 %v372, %v412
      %v418 = vmul.f32 %v375, %v412
      %v419 = vmul.f32 %v378, %v412
      %v420 = vmul.f32 %v381, %v412
      %v421 = vmul.f32 %v384, %v412
      %v422 = vmul.f32 %v387, %v412
      %v423 = vmul.f32 %v390, %v412
      %v424 = vmul.f32 %v393, %v412
      %v425 = vmul.f32 %v396, %v412
      %v426 = vmul.f32 %v399, %v412
      %v427 = vmul.f32 %v402, %v412
      %v428 = vmul.f32 %v405, %v412
      %v429 = vsub.f32 %v341, %v413
      %v430 = vsub.f32 %v342, %v414
      %v431 = vsub.f32 %v343, %v415
      %v432 = vsub.f32 %v344, %v416
      %v433 = vsub.f32 %v345, %v417
      %v434 = vsub.f32 %v346, %v418
      %v435 = vsub.f32 %v347, %v419
      %v436 = vsub.f32 %v348, %v420
      %v437 = vsub.f32 %v349, %v421
      %v438 = vsub.f32 %v350, %v422
      %v439 = vsub.f32 %v351, %v423
      %v440 = vsub.f32 %v352, %v424
      %v441 = vsub.f32 %v353, %v425
      %v442 = vsub.f32 %v354, %v426
      %v443 = vsub.f32 %v355, %v427
      %v444 = vsub.f32 %v356, %v428
      %v445 = vmul.f32 %v429, %v429
      %v446 = vmul.f32 %v430, %v430
      %v447 = vmul.f32 %v431, %v431
      %v448 = vmul.f32 %v432, %v432
      %v449 = vmul.f32 %v433, %v433
      %v450 = vmul.f32 %v434, %v434
      %v451 = vmul.f32 %v435, %v435
      %v452 = vmul.f32 %v436, %v436
      %v453 = vmul.f32 %v437, %v437
      %v454 = vmul.f32 %v438, %v438
      %v455 = vmul.f32 %v439, %v439
      %v456 = vmul.f32 %v440, %v440
      %v457 = vmul.f32 %v441, %v441
      %v458 = vmul.f32 %v442, %v442
      %v459 = vmul.f32 %v443, %v443
      %v460 = vmul.f32 %v444, %v444
      %v461 = vsel %vm357, %v445, 0.0
      %462 = vadd.xlane.f32.xlu0 %v461
      %v463 = vpop.xlane.xlu0 %462
      %v464 = vsel %vm357, %v446, 0.0
      %465 = vadd.xlane.f32.xlu0 %v464
      %v466 = vpop.xlane.xlu0 %465
      %v467 = vsel %vm357, %v447, 0.0
      %468 = vadd.xlane.f32.xlu0 %v467
      %v469 = vpop.xlane.xlu0 %468
      %v470 = vsel %vm357, %v448, 0.0
      %471 = vadd.xlane.f32.xlu0 %v470
      %v472 = vpop.xlane.xlu0 %471
      %v473 = vsel %vm357, %v449, 0.0
      %474 = vadd.xlane.f32.xlu0 %v473
      %v475 = vpop.xlane.xlu0 %474
      %v476 = vsel %vm357, %v450, 0.0
      %477 = vadd.xlane.f32.xlu0 %v476
      %v478 = vpop.xlane.xlu0 %477
      %v479 = vsel %vm357, %v451, 0.0
      %480 = vadd.xlane.f32.xlu0 %v479
      %v481 = vpop.xlane.xlu0 %480
      %v482 = vsel %vm357, %v452, 0.0
      %483 = vadd.xlane.f32.xlu0 %v482
      %v484 = vpop.xlane.xlu0 %483
      %v485 = vsel %vm357, %v453, 0.0
      %486 = vadd.xlane.f32.xlu0 %v485
      %v487 = vpop.xlane.xlu0 %486
      %v488 = vsel %vm357, %v454, 0.0
      %489 = vadd.xlane.f32.xlu0 %v488
      %v490 = vpop.xlane.xlu0 %489
      %v491 = vsel %vm357, %v455, 0.0
      %492 = vadd.xlane.f32.xlu0 %v491
      %v493 = vpop.xlane.xlu0 %492
      %v494 = vsel %vm357, %v456, 0.0
      %495 = vadd.xlane.f32.xlu0 %v494
      %v496 = vpop.xlane.xlu0 %495
      %v497 = vsel %vm357, %v457, 0.0
      %498 = vadd.xlane.f32.xlu0 %v497
      %v499 = vpop.xlane.xlu0 %498
      %v500 = vsel %vm357, %v458, 0.0
      %501 = vadd.xlane.f32.xlu0 %v500
      %v502 = vpop.xlane.xlu0 %501
      %v503 = vsel %vm357, %v459, 0.0
      %504 = vadd.xlane.f32.xlu0 %v503
      %v505 = vpop.xlane.xlu0 %504
      %v506 = vsel %vm357, %v460, 0.0
      %507 = vadd.xlane.f32.xlu0 %v506
      %v508 = vpop.xlane.xlu0 %507
      %v509 = vmul.f32 %v463, %v412
      %v510 = vmul.f32 %v466, %v412
      %v511 = vmul.f32 %v469, %v412
      %v512 = vmul.f32 %v472, %v412
      %v513 = vmul.f32 %v475, %v412
      %v514 = vmul.f32 %v478, %v412
      %v515 = vmul.f32 %v481, %v412
      %v516 = vmul.f32 %v484, %v412
      %v517 = vmul.f32 %v487, %v412
      %v518 = vmul.f32 %v490, %v412
      %v519 = vmul.f32 %v493, %v412
      %v520 = vmul.f32 %v496, %v412
      %v521 = vmul.f32 %v499, %v412
      %v522 = vmul.f32 %v502, %v412
      %v523 = vmul.f32 %v505, %v412
      %v524 = vmul.f32 %v508, %v412
      %v525 = vadd.f32 %v509, 1e-05
      %v526 = vadd.f32 %v510, 1e-05
      %v527 = vadd.f32 %v511, 1e-05
      %v528 = vadd.f32 %v512, 1e-05
      %v529 = vadd.f32 %v513, 1e-05
      %v530 = vadd.f32 %v514, 1e-05
      %v531 = vadd.f32 %v515, 1e-05
      %v532 = vadd.f32 %v516, 1e-05
      %v533 = vadd.f32 %v517, 1e-05
      %v534 = vadd.f32 %v518, 1e-05
      %v535 = vadd.f32 %v519, 1e-05
      %v536 = vadd.f32 %v520, 1e-05
      %v537 = vadd.f32 %v521, 1e-05
      %v538 = vadd.f32 %v522, 1e-05
      %v539 = vadd.f32 %v523, 1e-05
      %v540 = vadd.f32 %v524, 1e-05
      %v541 = vrsqrt.pop %v525
      %v542 = vmul.f32 %v541, %v525
      %v543 = vmul.f32 %v542, %v541
      %v544 = vmul.f32 0.5, %v543
      %v545 = vsub.f32 1.5, %v544
      %v546 = vmul.f32 %v541, %v545
      %vm547 = vweird.f32 %v525
      %vm548 = vweird.f32 %v541
      %vm549 = vmor %vm547, %vm548
      %v550 = vsel %vm549, %v541, %v546
      %v551 = vrsqrt.pop %v526
      %v552 = vmul.f32 %v551, %v526
      %v553 = vmul.f32 %v552, %v551
      %v554 = vmul.f32 0.5, %v553
      %v555 = vsub.f32 1.5, %v554
      %v556 = vmul.f32 %v551, %v555
      %vm557 = vweird.f32 %v526
      %vm558 = vweird.f32 %v551
      %vm559 = vmor %vm557, %vm558
      %v560 = vsel %vm559, %v551, %v556
      %v561 = vrsqrt.pop %v527
      %v562 = vmul.f32 %v561, %v527
      %v563 = vmul.f32 %v562, %v561
      %v564 = vmul.f32 0.5, %v563
      %v565 = vsub.f32 1.5, %v564
      %v566 = vmul.f32 %v561, %v565
      %vm567 = vweird.f32 %v527
      %vm568 = vweird.f32 %v561
      %vm569 = vmor %vm567, %vm568
      %v570 = vsel %vm569, %v561, %v566
      %v571 = vrsqrt.pop %v528
      %v572 = vmul.f32 %v571, %v528
      %v573 = vmul.f32 %v572, %v571
      %v574 = vmul.f32 0.5, %v573
      %v575 = vsub.f32 1.5, %v574
      %v576 = vmul.f32 %v571, %v575
      %vm577 = vweird.f32 %v528
      %vm578 = vweird.f32 %v571
      %vm579 = vmor %vm577, %vm578
      %v580 = vsel %vm579, %v571, %v576
      %v581 = vrsqrt.pop %v529
      %v582 = vmul.f32 %v581, %v529
      %v583 = vmul.f32 %v582, %v581
      %v584 = vmul.f32 0.5, %v583
      %v585 = vsub.f32 1.5, %v584
      %v586 = vmul.f32 %v581, %v585
      %vm587 = vweird.f32 %v529
      %vm588 = vweird.f32 %v581
      %vm589 = vmor %vm587, %vm588
      %v590 = vsel %vm589, %v581, %v586
      %v591 = vrsqrt.pop %v530
      %v592 = vmul.f32 %v591, %v530
      %v593 = vmul.f32 %v592, %v591
      %v594 = vmul.f32 0.5, %v593
      %v595 = vsub.f32 1.5, %v594
      %v596 = vmul.f32 %v591, %v595
      %vm597 = vweird.f32 %v530
      %vm598 = vweird.f32 %v591
      %vm599 = vmor %vm597, %vm598
      %v600 = vsel %vm599, %v591, %v596
      %v601 = vrsqrt.pop %v531
      %v602 = vmul.f32 %v601, %v531
      %v603 = vmul.f32 %v602, %v601
      %v604 = vmul.f32 0.5, %v603
      %v605 = vsub.f32 1.5, %v604
      %v606 = vmul.f32 %v601, %v605
      %vm607 = vweird.f32 %v531
      %vm608 = vweird.f32 %v601
      %vm609 = vmor %vm607, %vm608
      %v610 = vsel %vm609, %v601, %v606
      %v611 = vrsqrt.pop %v532
      %v612 = vmul.f32 %v611, %v532
      %v613 = vmul.f32 %v612, %v611
      %v614 = vmul.f32 0.5, %v613
      %v615 = vsub.f32 1.5, %v614
      %v616 = vmul.f32 %v611, %v615
      %vm617 = vweird.f32 %v532
      %vm618 = vweird.f32 %v611
      %vm619 = vmor %vm617, %vm618
      %v620 = vsel %vm619, %v611, %v616
      %v621 = vrsqrt.pop %v533
      %v622 = vmul.f32 %v621, %v533
      %v623 = vmul.f32 %v622, %v621
      %v624 = vmul.f32 0.5, %v623
      %v625 = vsub.f32 1.5, %v624
      %v626 = vmul.f32 %v621, %v625
      %vm627 = vweird.f32 %v533
      %vm628 = vweird.f32 %v621
      %vm629 = vmor %vm627, %vm628
      %v630 = vsel %vm629, %v621, %v626
      %v631 = vrsqrt.pop %v534
      %v632 = vmul.f32 %v631, %v534
      %v633 = vmul.f32 %v632, %v631
      %v634 = vmul.f32 0.5, %v633
      %v635 = vsub.f32 1.5, %v634
      %v636 = vmul.f32 %v631, %v635
      %vm637 = vweird.f32 %v534
      %vm638 = vweird.f32 %v631
      %vm639 = vmor %vm637, %vm638
      %v640 = vsel %vm639, %v631, %v636
      %v641 = vrsqrt.pop %v535
      %v642 = vmul.f32 %v641, %v535
      %v643 = vmul.f32 %v642, %v641
      %v644 = vmul.f32 0.5, %v643
      %v645 = vsub.f32 1.5, %v644
      %v646 = vmul.f32 %v641, %v645
      %vm647 = vweird.f32 %v535
      %vm648 = vweird.f32 %v641
      %vm649 = vmor %vm647, %vm648
      %v650 = vsel %vm649, %v641, %v646
      %v651 = vrsqrt.pop %v536
      %v652 = vmul.f32 %v651, %v536
      %v653 = vmul.f32 %v652, %v651
      %v654 = vmul.f32 0.5, %v653
      %v655 = vsub.f32 1.5, %v654
      %v656 = vmul.f32 %v651, %v655
      %vm657 = vweird.f32 %v536
      %vm658 = vweird.f32 %v651
      %vm659 = vmor %vm657, %vm658
      %v660 = vsel %vm659, %v651, %v656
      %v661 = vrsqrt.pop %v537
      %v662 = vmul.f32 %v661, %v537
      %v663 = vmul.f32 %v662, %v661
      %v664 = vmul.f32 0.5, %v663
      %v665 = vsub.f32 1.5, %v664
      %v666 = vmul.f32 %v661, %v665
      %vm667 = vweird.f32 %v537
      %vm668 = vweird.f32 %v661
      %vm669 = vmor %vm667, %vm668
      %v670 = vsel %vm669, %v661, %v666
      %v671 = vrsqrt.pop %v538
      %v672 = vmul.f32 %v671, %v538
      %v673 = vmul.f32 %v672, %v671
      %v674 = vmul.f32 0.5, %v673
      %v675 = vsub.f32 1.5, %v674
      %v676 = vmul.f32 %v671, %v675
      %vm677 = vweird.f32 %v538
      %vm678 = vweird.f32 %v671
      %vm679 = vmor %vm677, %vm678
      %v680 = vsel %vm679, %v671, %v676
      %v681 = vrsqrt.pop %v539
      %v682 = vmul.f32 %v681, %v539
      %v683 = vmul.f32 %v682, %v681
      %v684 = vmul.f32 0.5, %v683
      %v685 = vsub.f32 1.5, %v684
      %v686 = vmul.f32 %v681, %v685
      %vm687 = vweird.f32 %v539
      %vm688 = vweird.f32 %v681
      %vm689 = vmor %vm687, %vm688
      %v690 = vsel %vm689, %v681, %v686
      %v691 = vrsqrt.pop %v540
      %v692 = vmul.f32 %v691, %v540
      %v693 = vmul.f32 %v692, %v691
      %v694 = vmul.f32 0.5, %v693
      %v695 = vsub.f32 1.5, %v694
      %v696 = vmul.f32 %v691, %v695
      %vm697 = vweird.f32 %v540
      %vm698 = vweird.f32 %v691
      %vm699 = vmor %vm697, %vm698
      %v700 = vsel %vm699, %v691, %v696
      %v701 = vmul.f32 %v429, %v550
      %v702 = vmul.f32 %v430, %v560
      %v703 = vmul.f32 %v431, %v570
      %v704 = vmul.f32 %v432, %v580
      %v705 = vmul.f32 %v433, %v590
      %v706 = vmul.f32 %v434, %v600
      %v707 = vmul.f32 %v435, %v610
      %v708 = vmul.f32 %v436, %v620
      %v709 = vmul.f32 %v437, %v630
      %v710 = vmul.f32 %v438, %v640
      %v711 = vmul.f32 %v439, %v650
      %v712 = vmul.f32 %v440, %v660
      %v713 = vmul.f32 %v441, %v670
      %v714 = vmul.f32 %v442, %v680
      %v715 = vmul.f32 %v443, %v690
      %v716 = vmul.f32 %v444, %v700
      %v717 = vperm.slane %v340, 0
      %v718 = vmul.f32 %v701, %v717
      %v719 = vmul.f32 %v702, %v717
      %v720 = vmul.f32 %v703, %v717
      %v721 = vmul.f32 %v704, %v717
      %v722 = vmul.f32 %v705, %v717
      %v723 = vmul.f32 %v706, %v717
      %v724 = vmul.f32 %v707, %v717
      %v725 = vmul.f32 %v708, %v717
      %v726 = vmul.f32 %v709, %v717
      %v727 = vmul.f32 %v710, %v717
      %v728 = vmul.f32 %v711, %v717
      %v729 = vmul.f32 %v712, %v717
      %v730 = vmul.f32 %v713, %v717
      %v731 = vmul.f32 %v714, %v717
      %v732 = vmul.f32 %v715, %v717
      %v733 = vmul.f32 %v716, %v717
      %v734 = vperm.slane %v340, 1
      %v735 = vadd.f32 %v718, %v734
      %v736 = vadd.f32 %v719, %v734
      %v737 = vadd.f32 %v720, %v734
      %v738 = vadd.f32 %v721, %v734
      %v739 = vadd.f32 %v722, %v734
      %v740 = vadd.f32 %v723, %v734
      %v741 = vadd.f32 %v724, %v734
      %v742 = vadd.f32 %v725, %v734
      %v743 = vadd.f32 %v726, %v734
      %v744 = vadd.f32 %v727, %v734
      %v745 = vadd.f32 %v728, %v734
      %v746 = vadd.f32 %v729, %v734
      %v747 = vadd.f32 %v730, %v734
      %v748 = vadd.f32 %v731, %v734
      %v749 = vadd.f32 %v732, %v734
      %v750 = vadd.f32 %v733, %v734
      %v751 = vld [vmem:[%s328] sm:$0xff]
      %v752 = vld [vmem:[%s328 + $0x8] sm:$0xff]
      %v753 = vld [vmem:[%s328 + $0x10] sm:$0xff]
      %v754 = vld [vmem:[%s328 + $0x18] sm:$0xff]
      %v755 = vld [vmem:[%s328 + $0x20] sm:$0xff]
      %v756 = vld [vmem:[%s328 + $0x28] sm:$0xff]
      %v757 = vld [vmem:[%s328 + $0x30] sm:$0xff]
      %v758 = vld [vmem:[%s328 + $0x38] sm:$0xff]
      %v759 = vld [vmem:[%s328 + $0x40] sm:$0xff]
      %v760 = vld [vmem:[%s328 + $0x48] sm:$0xff]
      %v761 = vld [vmem:[%s328 + $0x50] sm:$0xff]
      %v762 = vld [vmem:[%s328 + $0x58] sm:$0xff]
      %v763 = vld [vmem:[%s328 + $0x60] sm:$0xff]
      %v764 = vld [vmem:[%s328 + $0x68] sm:$0xff]
      %v765 = vld [vmem:[%s328 + $0x70] sm:$0xff]
      %v766 = vld [vmem:[%s328 + $0x78] sm:$0xff]
      %v767 = vsel %vm357, %v751, 0.0
      %768 = vadd.xlane.f32.xlu0 %v767
      %v769 = vpop.xlane.xlu0 %768
      %v770 = vsel %vm357, %v752, 0.0
      %771 = vadd.xlane.f32.xlu0 %v770
      %v772 = vpop.xlane.xlu0 %771
      %v773 = vsel %vm357, %v753, 0.0
      %774 = vadd.xlane.f32.xlu0 %v773
      %v775 = vpop.xlane.xlu0 %774
      %v776 = vsel %vm357, %v754, 0.0
      %777 = vadd.xlane.f32.xlu0 %v776
      %v778 = vpop.xlane.xlu0 %777
      %v779 = vsel %vm357, %v755, 0.0
      %780 = vadd.xlane.f32.xlu0 %v779
      %v781 = vpop.xlane.xlu0 %780
      %v782 = vsel %vm357, %v756, 0.0
      %783 = vadd.xlane.f32.xlu0 %v782
      %v784 = vpop.xlane.xlu0 %783
      %v785 = vsel %vm357, %v757, 0.0
      %786 = vadd.xlane.f32.xlu0 %v785
      %v787 = vpop.xlane.xlu0 %786
      %v788 = vsel %vm357, %v758, 0.0
      %789 = vadd.xlane.f32.xlu0 %v788
      %v790 = vpop.xlane.xlu0 %789
      %v791 = vsel %vm357, %v759, 0.0
      %792 = vadd.xlane.f32.xlu0 %v791
      %v793 = vpop.xlane.xlu0 %792
      %v794 = vsel %vm357, %v760, 0.0
      %795 = vadd.xlane.f32.xlu0 %v794
      %v796 = vpop.xlane.xlu0 %795
      %v797 = vsel %vm357, %v761, 0.0
      %798 = vadd.xlane.f32.xlu0 %v797
      %v799 = vpop.xlane.xlu0 %798
      %v800 = vsel %vm357, %v762, 0.0
      %801 = vadd.xlane.f32.xlu0 %v800
      %v802 = vpop.xlane.xlu0 %801
      %v803 = vsel %vm357, %v763, 0.0
      %804 = vadd.xlane.f32.xlu0 %v803
      %v805 = vpop.xlane.xlu0 %804
      %v806 = vsel %vm357, %v764, 0.0
      %807 = vadd.xlane.f32.xlu0 %v806
      %v808 = vpop.xlane.xlu0 %807
      %v809 = vsel %vm357, %v765, 0.0
      %810 = vadd.xlane.f32.xlu0 %v809
      %v811 = vpop.xlane.xlu0 %810
      %v812 = vsel %vm357, %v766, 0.0
      %813 = vadd.xlane.f32.xlu0 %v812
      %v814 = vpop.xlane.xlu0 %813
      %v815 = vmul.f32 %v769, %v412
      %v816 = vmul.f32 %v772, %v412
      %v817 = vmul.f32 %v775, %v412
      %v818 = vmul.f32 %v778, %v412
      %v819 = vmul.f32 %v781, %v412
      %v820 = vmul.f32 %v784, %v412
      %v821 = vmul.f32 %v787, %v412
      %v822 = vmul.f32 %v790, %v412
      %v823 = vmul.f32 %v793, %v412
      %v824 = vmul.f32 %v796, %v412
      %v825 = vmul.f32 %v799, %v412
      %v826 = vmul.f32 %v802, %v412
      %v827 = vmul.f32 %v805, %v412
      %v828 = vmul.f32 %v808, %v412
      %v829 = vmul.f32 %v811, %v412
      %v830 = vmul.f32 %v814, %v412
      %v831 = vsub.f32 %v751, %v815
      %v832 = vsub.f32 %v752, %v816
      %v833 = vsub.f32 %v753, %v817
      %v834 = vsub.f32 %v754, %v818
      %v835 = vsub.f32 %v755, %v819
      %v836 = vsub.f32 %v756, %v820
      %v837 = vsub.f32 %v757, %v821
      %v838 = vsub.f32 %v758, %v822
      %v839 = vsub.f32 %v759, %v823
      %v840 = vsub.f32 %v760, %v824
      %v841 = vsub.f32 %v761, %v825
      %v842 = vsub.f32 %v762, %v826
      %v843 = vsub.f32 %v763, %v827
      %v844 = vsub.f32 %v764, %v828
      %v845 = vsub.f32 %v765, %v829
      %v846 = vsub.f32 %v766, %v830
      %v847 = vmul.f32 %v831, %v831
      %v848 = vmul.f32 %v832, %v832
      %v849 = vmul.f32 %v833, %v833
      %v850 = vmul.f32 %v834, %v834
      %v851 = vmul.f32 %v835, %v835
      %v852 = vmul.f32 %v836, %v836
      %v853 = vmul.f32 %v837, %v837
      %v854 = vmul.f32 %v838, %v838
      %v855 = vmul.f32 %v839, %v839
      %v856 = vmul.f32 %v840, %v840
      %v857 = vmul.f32 %v841, %v841
      %v858 = vmul.f32 %v842, %v842
      %v859 = vmul.f32 %v843, %v843
      %v860 = vmul.f32 %v844, %v844
      %v861 = vmul.f32 %v845, %v845
      %v862 = vmul.f32 %v846, %v846
      %v863 = vsel %vm357, %v847, 0.0
      %864 = vadd.xlane.f32.xlu0 %v863
      %v865 = vpop.xlane.xlu0 %864
      %v866 = vsel %vm357, %v848, 0.0
      %867 = vadd.xlane.f32.xlu0 %v866
      %v868 = vpop.xlane.xlu0 %867
      %v869 = vsel %vm357, %v849, 0.0
      %870 = vadd.xlane.f32.xlu0 %v869
      %v871 = vpop.xlane.xlu0 %870
      %v872 = vsel %vm357, %v850, 0.0
      %873 = vadd.xlane.f32.xlu0 %v872
      %v874 = vpop.xlane.xlu0 %873
      %v875 = vsel %vm357, %v851, 0.0
      %876 = vadd.xlane.f32.xlu0 %v875
      %v877 = vpop.xlane.xlu0 %876
      %v878 = vsel %vm357, %v852, 0.0
      %879 = vadd.xlane.f32.xlu0 %v878
      %v880 = vpop.xlane.xlu0 %879
      %v881 = vsel %vm357, %v853, 0.0
      %882 = vadd.xlane.f32.xlu0 %v881
      %v883 = vpop.xlane.xlu0 %882
      %v884 = vsel %vm357, %v854, 0.0
      %885 = vadd.xlane.f32.xlu0 %v884
      %v886 = vpop.xlane.xlu0 %885
      %v887 = vsel %vm357, %v855, 0.0
      %888 = vadd.xlane.f32.xlu0 %v887
      %v889 = vpop.xlane.xlu0 %888
      %v890 = vsel %vm357, %v856, 0.0
      %891 = vadd.xlane.f32.xlu0 %v890
      %v892 = vpop.xlane.xlu0 %891
      %v893 = vsel %vm357, %v857, 0.0
      %894 = vadd.xlane.f32.xlu0 %v893
      %v895 = vpop.xlane.xlu0 %894
      %v896 = vsel %vm357, %v858, 0.0
      %897 = vadd.xlane.f32.xlu0 %v896
      %v898 = vpop.xlane.xlu0 %897
      %v899 = vsel %vm357, %v859, 0.0
      %900 = vadd.xlane.f32.xlu0 %v899
      %v901 = vpop.xlane.xlu0 %900
      %v902 = vsel %vm357, %v860, 0.0
      %903 = vadd.xlane.f32.xlu0 %v902
      %v904 = vpop.xlane.xlu0 %903
      %v905 = vsel %vm357, %v861, 0.0
      %906 = vadd.xlane.f32.xlu0 %v905
      %v907 = vpop.xlane.xlu0 %906
      %v908 = vsel %vm357, %v862, 0.0
      %909 = vadd.xlane.f32.xlu0 %v908
      %v910 = vpop.xlane.xlu0 %909
      %v911 = vmul.f32 %v865, %v412
      %v912 = vmul.f32 %v868, %v412
      %v913 = vmul.f32 %v871, %v412
      %v914 = vmul.f32 %v874, %v412
      %v915 = vmul.f32 %v877, %v412
      %v916 = vmul.f32 %v880, %v412
      %v917 = vmul.f32 %v883, %v412
      %v918 = vmul.f32 %v886, %v412
      %v919 = vmul.f32 %v889, %v412
      %v920 = vmul.f32 %v892, %v412
      %v921 = vmul.f32 %v895, %v412
      %v922 = vmul.f32 %v898, %v412
      %v923 = vmul.f32 %v901, %v412
      %v924 = vmul.f32 %v904, %v412
      %v925 = vmul.f32 %v907, %v412
      %v926 = vmul.f32 %v910, %v412
      %v927 = vadd.f32 %v911, 1e-05
      %v928 = vadd.f32 %v912, 1e-05
      %v929 = vadd.f32 %v913, 1e-05
      %v930 = vadd.f32 %v914, 1e-05
      %v931 = vadd.f32 %v915, 1e-05
      %v932 = vadd.f32 %v916, 1e-05
      %v933 = vadd.f32 %v917, 1e-05
      %v934 = vadd.f32 %v918, 1e-05
      %v935 = vadd.f32 %v919, 1e-05
      %v936 = vadd.f32 %v920, 1e-05
      %v937 = vadd.f32 %v921, 1e-05
      %v938 = vadd.f32 %v922, 1e-05
      %v939 = vadd.f32 %v923, 1e-05
      %v940 = vadd.f32 %v924, 1e-05
      %v941 = vadd.f32 %v925, 1e-05
      %v942 = vadd.f32 %v926, 1e-05
      %v943 = vrsqrt.pop %v927
      %v944 = vmul.f32 %v943, %v927
      %v945 = vmul.f32 %v944, %v943
      %v946 = vmul.f32 0.5, %v945
      %v947 = vsub.f32 1.5, %v946
      %v948 = vmul.f32 %v943, %v947
      %vm949 = vweird.f32 %v927
      %vm950 = vweird.f32 %v943
      %vm951 = vmor %vm949, %vm950
      %v952 = vsel %vm951, %v943, %v948
      %v953 = vrsqrt.pop %v928
      %v954 = vmul.f32 %v953, %v928
      %v955 = vmul.f32 %v954, %v953
      %v956 = vmul.f32 0.5, %v955
      %v957 = vsub.f32 1.5, %v956
      %v958 = vmul.f32 %v953, %v957
      %vm959 = vweird.f32 %v928
      %vm960 = vweird.f32 %v953
      %vm961 = vmor %vm959, %vm960
      %v962 = vsel %vm961, %v953, %v958
      %v963 = vrsqrt.pop %v929
      %v964 = vmul.f32 %v963, %v929
      %v965 = vmul.f32 %v964, %v963
      %v966 = vmul.f32 0.5, %v965
      %v967 = vsub.f32 1.5, %v966
      %v968 = vmul.f32 %v963, %v967
      %vm969 = vweird.f32 %v929
      %vm970 = vweird.f32 %v963
      %vm971 = vmor %vm969, %vm970
      %v972 = vsel %vm971, %v963, %v968
      %v973 = vrsqrt.pop %v930
      %v974 = vmul.f32 %v973, %v930
      %v975 = vmul.f32 %v974, %v973
      %v976 = vmul.f32 0.5, %v975
      %v977 = vsub.f32 1.5, %v976
      %v978 = vmul.f32 %v973, %v977
      %vm979 = vweird.f32 %v930
      %vm980 = vweird.f32 %v973
      %vm981 = vmor %vm979, %vm980
      %v982 = vsel %vm981, %v973, %v978
      %v983 = vrsqrt.pop %v931
      %v984 = vmul.f32 %v983, %v931
      %v985 = vmul.f32 %v984, %v983
      %v986 = vmul.f32 0.5, %v985
      %v987 = vsub.f32 1.5, %v986
      %v988 = vmul.f32 %v983, %v987
      %vm989 = vweird.f32 %v931
      %vm990 = vweird.f32 %v983
      %vm991 = vmor %vm989, %vm990
      %v992 = vsel %vm991, %v983, %v988
      %v993 = vrsqrt.pop %v932
      %v994 = vmul.f32 %v993, %v932
      %v995 = vmul.f32 %v994, %v993
      %v996 = vmul.f32 0.5, %v995
      %v997 = vsub.f32 1.5, %v996
      %v998 = vmul.f32 %v993, %v997
      %vm999 = vweird.f32 %v932
      %vm1000 = vweird.f32 %v993
      %vm1001 = vmor %vm999, %vm1000
      %v1002 = vsel %vm1001, %v993, %v998
      %v1003 = vrsqrt.pop %v933
      %v1004 = vmul.f32 %v1003, %v933
      %v1005 = vmul.f32 %v1004, %v1003
      %v1006 = vmul.f32 0.5, %v1005
      %v1007 = vsub.f32 1.5, %v1006
      %v1008 = vmul.f32 %v1003, %v1007
      %vm1009 = vweird.f32 %v933
      %vm1010 = vweird.f32 %v1003
      %vm1011 = vmor %vm1009, %vm1010
      %v1012 = vsel %vm1011, %v1003, %v1008
      %v1013 = vrsqrt.pop %v934
      %v1014 = vmul.f32 %v1013, %v934
      %v1015 = vmul.f32 %v1014, %v1013
      %v1016 = vmul.f32 0.5, %v1015
      %v1017 = vsub.f32 1.5, %v1016
      %v1018 = vmul.f32 %v1013, %v1017
      %vm1019 = vweird.f32 %v934
      %vm1020 = vweird.f32 %v1013
      %vm1021 = vmor %vm1019, %vm1020
      %v1022 = vsel %vm1021, %v1013, %v1018
      %v1023 = vrsqrt.pop %v935
      %v1024 = vmul.f32 %v1023, %v935
      %v1025 = vmul.f32 %v1024, %v1023
      %v1026 = vmul.f32 0.5, %v1025
      %v1027 = vsub.f32 1.5, %v1026
      %v1028 = vmul.f32 %v1023, %v1027
      %vm1029 = vweird.f32 %v935
      %vm1030 = vweird.f32 %v1023
      %vm1031 = vmor %vm1029, %vm1030
      %v1032 = vsel %vm1031, %v1023, %v1028
      %v1033 = vrsqrt.pop %v936
      %v1034 = vmul.f32 %v1033, %v936
      %v1035 = vmul.f32 %v1034, %v1033
      %v1036 = vmul.f32 0.5, %v1035
      %v1037 = vsub.f32 1.5, %v1036
      %v1038 = vmul.f32 %v1033, %v1037
      %vm1039 = vweird.f32 %v936
      %vm1040 = vweird.f32 %v1033
      %vm1041 = vmor %vm1039, %vm1040
      %v1042 = vsel %vm1041, %v1033, %v1038
      %v1043 = vrsqrt.pop %v937
      %v1044 = vmul.f32 %v1043, %v937
      %v1045 = vmul.f32 %v1044, %v1043
      %v1046 = vmul.f32 0.5, %v1045
      %v1047 = vsub.f32 1.5, %v1046
      %v1048 = vmul.f32 %v1043, %v1047
      %vm1049 = vweird.f32 %v937
      %vm1050 = vweird.f32 %v1043
      %vm1051 = vmor %vm1049, %vm1050
      %v1052 = vsel %vm1051, %v1043, %v1048
      %v1053 = vrsqrt.pop %v938
      %v1054 = vmul.f32 %v1053, %v938
      %v1055 = vmul.f32 %v1054, %v1053
      %v1056 = vmul.f32 0.5, %v1055
      %v1057 = vsub.f32 1.5, %v1056
      %v1058 = vmul.f32 %v1053, %v1057
      %vm1059 = vweird.f32 %v938
      %vm1060 = vweird.f32 %v1053
      %vm1061 = vmor %vm1059, %vm1060
      %v1062 = vsel %vm1061, %v1053, %v1058
      %v1063 = vrsqrt.pop %v939
      %v1064 = vmul.f32 %v1063, %v939
      %v1065 = vmul.f32 %v1064, %v1063
      %v1066 = vmul.f32 0.5, %v1065
      %v1067 = vsub.f32 1.5, %v1066
      %v1068 = vmul.f32 %v1063, %v1067
      %vm1069 = vweird.f32 %v939
      %vm1070 = vweird.f32 %v1063
      %vm1071 = vmor %vm1069, %vm1070
      %v1072 = vsel %vm1071, %v1063, %v1068
      %v1073 = vrsqrt.pop %v940
      %v1074 = vmul.f32 %v1073, %v940
      %v1075 = vmul.f32 %v1074, %v1073
      %v1076 = vmul.f32 0.5, %v1075
      %v1077 = vsub.f32 1.5, %v1076
      %v1078 = vmul.f32 %v1073, %v1077
      %vm1079 = vweird.f32 %v940
      %vm1080 = vweird.f32 %v1073
      %vm1081 = vmor %vm1079, %vm1080
      %v1082 = vsel %vm1081, %v1073, %v1078
      %v1083 = vrsqrt.pop %v941
      %v1084 = vmul.f32 %v1083, %v941
      %v1085 = vmul.f32 %v1084, %v1083
      %v1086 = vmul.f32 0.5, %v1085
      %v1087 = vsub.f32 1.5, %v1086
      %v1088 = vmul.f32 %v1083, %v1087
      %vm1089 = vweird.f32 %v941
      %vm1090 = vweird.f32 %v1083
      %vm1091 = vmor %vm1089, %vm1090
      %v1092 = vsel %vm1091, %v1083, %v1088
      %v1093 = vrsqrt.pop %v942
      %v1094 = vmul.f32 %v1093, %v942
      %v1095 = vmul.f32 %v1094, %v1093
      %v1096 = vmul.f32 0.5, %v1095
      %v1097 = vsub.f32 1.5, %v1096
      %v1098 = vmul.f32 %v1093, %v1097
      %vm1099 = vweird.f32 %v942
      %vm1100 = vweird.f32 %v1093
      %vm1101 = vmor %vm1099, %vm1100
      %v1102 = vsel %vm1101, %v1093, %v1098
      %v1103 = vmul.f32 %v831, %v952
      %v1104 = vmul.f32 %v832, %v962
      %v1105 = vmul.f32 %v833, %v972
      %v1106 = vmul.f32 %v834, %v982
      %v1107 = vmul.f32 %v835, %v992
      %v1108 = vmul.f32 %v836, %v1002
      %v1109 = vmul.f32 %v837, %v1012
      %v1110 = vmul.f32 %v838, %v1022
      %v1111 = vmul.f32 %v839, %v1032
      %v1112 = vmul.f32 %v840, %v1042
      %v1113 = vmul.f32 %v841, %v1052
      %v1114 = vmul.f32 %v842, %v1062
      %v1115 = vmul.f32 %v843, %v1072
      %v1116 = vmul.f32 %v844, %v1082
      %v1117 = vmul.f32 %v845, %v1092
      %v1118 = vmul.f32 %v846, %v1102
      %v1119 = vperm.slane %v340, 2
      %v1120 = vmul.f32 %v1103, %v1119
      %v1121 = vmul.f32 %v1104, %v1119
      %v1122 = vmul.f32 %v1105, %v1119
      %v1123 = vmul.f32 %v1106, %v1119
      %v1124 = vmul.f32 %v1107, %v1119
      %v1125 = vmul.f32 %v1108, %v1119
      %v1126 = vmul.f32 %v1109, %v1119
      %v1127 = vmul.f32 %v1110, %v1119
      %v1128 = vmul.f32 %v1111, %v1119
      %v1129 = vmul.f32 %v1112, %v1119
      %v1130 = vmul.f32 %v1113, %v1119
      %v1131 = vmul.f32 %v1114, %v1119
      %v1132 = vmul.f32 %v1115, %v1119
      %v1133 = vmul.f32 %v1116, %v1119
      %v1134 = vmul.f32 %v1117, %v1119
      %v1135 = vmul.f32 %v1118, %v1119
      %v1136 = vperm.slane %v340, 3
      %v1137 = vadd.f32 %v1120, %v1136
      %v1138 = vadd.f32 %v1121, %v1136
      %v1139 = vadd.f32 %v1122, %v1136
      %v1140 = vadd.f32 %v1123, %v1136
      %v1141 = vadd.f32 %v1124, %v1136
      %v1142 = vadd.f32 %v1125, %v1136
      %v1143 = vadd.f32 %v1126, %v1136
      %v1144 = vadd.f32 %v1127, %v1136
      %v1145 = vadd.f32 %v1128, %v1136
      %v1146 = vadd.f32 %v1129, %v1136
      %v1147 = vadd.f32 %v1130, %v1136
      %v1148 = vadd.f32 %v1131, %v1136
      %v1149 = vadd.f32 %v1132, %v1136
      %v1150 = vadd.f32 %v1133, %v1136
      %v1151 = vadd.f32 %v1134, %v1136
      %v1152 = vadd.f32 %v1135, %v1136
      %v1153 = vpack.c.bf16 %v736, %v735
      %v1154 = vpack.c.bf16 %v738, %v737
      %v1155 = vpack.c.bf16 %v740, %v739
      %v1156 = vpack.c.bf16 %v742, %v741
      %v1157 = vpack.c.bf16 %v744, %v743
      %v1158 = vpack.c.bf16 %v746, %v745
      %v1159 = vpack.c.bf16 %v748, %v747
      %v1160 = vpack.c.bf16 %v750, %v749
      %v1161 = vpack.c.bf16 %v1138, %v1137
      %v1162 = vpack.c.bf16 %v1140, %v1139
      %v1163 = vpack.c.bf16 %v1142, %v1141
      %v1164 = vpack.c.bf16 %v1144, %v1143
      %v1165 = vpack.c.bf16 %v1146, %v1145
      %v1166 = vpack.c.bf16 %v1148, %v1147
      %v1167 = vpack.c.bf16 %v1150, %v1149
      %v1168 = vpack.c.bf16 %v1152, %v1151
      %v1170 = vsel %vm357, %v1153, 0
      %v1173 = vsel %vm357, %v1154, 0
      %v1176 = vsel %vm357, %v1155, 0
      %v1179 = vsel %vm357, %v1156, 0
      %v1182 = vsel %vm357, %v1157, 0
      %v1185 = vsel %vm357, %v1158, 0
      %v1188 = vsel %vm357, %v1159, 0
      %v1191 = vsel %vm357, %v1160, 0
      %v1194 = vsel %vm357, %v1161, 0
      %v1197 = vsel %vm357, %v1162, 0
      %v1200 = vsel %vm357, %v1163, 0
      %v1203 = vsel %vm357, %v1164, 0
      %v1206 = vsel %vm357, %v1165, 0
      %v1209 = vsel %vm357, %v1166, 0
      %v1212 = vsel %vm357, %v1167, 0
      %v1215 = vsel %vm357, %v1168, 0
      %1217 = vmatpush.bf16.xpose.msra.mxu0 %v1215
      %1218 = vmatpush.bf16.xpose.msra.mxu0 %v1212
      %1219 = vmatpush.bf16.xpose.msra.mxu0 %v1209
      %1220 = vmatpush.bf16.xpose.msra.mxu0 %v1206
      %1221 = vmatpush.bf16.xpose.msra.mxu0 %v1203
      %1222 = vmatpush.bf16.xpose.msra.mxu0 %v1200
      %1223 = vmatpush.bf16.xpose.msra.mxu0 %v1197
      %1224 = vmatpush.bf16.xpose.msra.mxu0 %v1194
      %1225 = vmatmul.bf16.gmra.mxu0 %v1170
      %v1226 = vpop.f32.mrf.mxu0
      %v1227 = vadd.f32 0.0, %v1226
      %v1228 = vpop.f32.mrf.mxu0
      %v1229 = vadd.f32 0.0, %v1228
      %1230 = vmatmul.bf16.gmra.mxu0 %v1173
      %v1231 = vpop.f32.mrf.mxu0
      %v1232 = vadd.f32 0.0, %v1231
      %v1233 = vpop.f32.mrf.mxu0
      %v1234 = vadd.f32 0.0, %v1233
      %1235 = vmatmul.bf16.gmra.mxu0 %v1176
      %v1236 = vpop.f32.mrf.mxu0
      %v1237 = vadd.f32 0.0, %v1236
      %v1238 = vpop.f32.mrf.mxu0
      %v1239 = vadd.f32 0.0, %v1238
      %1240 = vmatmul.bf16.gmra.mxu0 %v1179
      %v1241 = vpop.f32.mrf.mxu0
      %v1242 = vadd.f32 0.0, %v1241
      %v1243 = vpop.f32.mrf.mxu0
      %v1244 = vadd.f32 0.0, %v1243
      %1245 = vmatmul.bf16.gmra.mxu0 %v1182
      %v1246 = vpop.f32.mrf.mxu0
      %v1247 = vadd.f32 0.0, %v1246
      %v1248 = vpop.f32.mrf.mxu0
      %v1249 = vadd.f32 0.0, %v1248
      %1250 = vmatmul.bf16.gmra.mxu0 %v1185
      %v1251 = vpop.f32.mrf.mxu0
      %v1252 = vadd.f32 0.0, %v1251
      %v1253 = vpop.f32.mrf.mxu0
      %v1254 = vadd.f32 0.0, %v1253
      %1255 = vmatmul.bf16.gmra.mxu0 %v1188
      %v1256 = vpop.f32.mrf.mxu0
      %v1257 = vadd.f32 0.0, %v1256
      %v1258 = vpop.f32.mrf.mxu0
      %v1259 = vadd.f32 0.0, %v1258
      %1260 = vmatmul.bf16.gmra.mxu0 %v1191
      %v1261 = vpop.f32.mrf.mxu0
      %v1262 = vadd.f32 0.0, %v1261
      %v1263 = vpop.f32.mrf.mxu0
      %v1264 = vadd.f32 0.0, %v1263
      %1265 = vdwg.mxu0
      %v1266 = vmul.f32 %v1227, 0.17677669
      %v1267 = vmul.f32 %v1229, 0.17677669
      %v1268 = vmul.f32 %v1232, 0.17677669
      %v1269 = vmul.f32 %v1234, 0.17677669
      %v1270 = vmul.f32 %v1237, 0.17677669
      %v1271 = vmul.f32 %v1239, 0.17677669
      %v1272 = vmul.f32 %v1242, 0.17677669
      %v1273 = vmul.f32 %v1244, 0.17677669
      %v1274 = vmul.f32 %v1247, 0.17677669
      %v1275 = vmul.f32 %v1249, 0.17677669
      %v1276 = vmul.f32 %v1252, 0.17677669
      %v1277 = vmul.f32 %v1254, 0.17677669
      %v1278 = vmul.f32 %v1257, 0.17677669
      %v1279 = vmul.f32 %v1259, 0.17677669
      %v1280 = vmul.f32 %v1262, 0.17677669
      %v1281 = vmul.f32 %v1264, 0.17677669
      %v1282 = vlaneseq
      %v1283 = vshrl.u32 %v1282, 7
      %v1284 = vadd.s32 %v1283, 8
      %v1285 = vadd.s32 %v1283, 16
      %v1286 = vadd.s32 %v1283, 24
      %v1287 = vadd.s32 %v1283, 32
      %v1288 = vadd.s32 %v1283, 40
      %v1289 = vadd.s32 %v1283, 48
      %v1290 = vadd.s32 %v1283, 56
      %v1291 = vadd.s32 %v1283, 64
      %v1292 = vadd.s32 %v1283, 72
      %v1293 = vadd.s32 %v1283, 80
      %v1294 = vadd.s32 %v1283, 88
      %v1295 = vadd.s32 %v1283, 96
      %v1296 = vadd.s32 %v1283, 104
      %v1297 = vadd.s32 %v1283, 112
      %v1298 = vadd.s32 %v1283, 120
      %vm1299 = vcmp.lt.s32.totalorder %v1283, 0
      %v1300 = vsub.s32 0, %v1283
      %v1301 = vsel %vm1299, %v1300, %v1283
      %v1302 = vshrl.u32 %v1301, 3
      %v1303 = vand.u32 %v1301, 7
      %v1304 = vsub.s32 0, %v1303
      %v1305 = vsel %vm1299, %v1304, %v1303
      %vm1306 = vcmp.lt.s32.totalorder %v1284, 0
      %v1307 = vsub.s32 0, %v1284
      %v1308 = vsel %vm1306, %v1307, %v1284
      %v1309 = vshrl.u32 %v1308, 3
      %v1310 = vand.u32 %v1308, 7
      %v1311 = vsub.s32 0, %v1310
      %v1312 = vsel %vm1306, %v1311, %v1310
      %vm1313 = vcmp.lt.s32.totalorder %v1285, 0
      %v1314 = vsub.s32 0, %v1285
      %v1315 = vsel %vm1313, %v1314, %v1285
      %v1316 = vshrl.u32 %v1315, 3
      %v1317 = vand.u32 %v1315, 7
      %v1318 = vsub.s32 0, %v1317
      %v1319 = vsel %vm1313, %v1318, %v1317
      %vm1320 = vcmp.lt.s32.totalorder %v1286, 0
      %v1321 = vsub.s32 0, %v1286
      %v1322 = vsel %vm1320, %v1321, %v1286
      %v1323 = vshrl.u32 %v1322, 3
      %v1324 = vand.u32 %v1322, 7
      %v1325 = vsub.s32 0, %v1324
      %v1326 = vsel %vm1320, %v1325, %v1324
      %vm1327 = vcmp.lt.s32.totalorder %v1287, 0
      %v1328 = vsub.s32 0, %v1287
      %v1329 = vsel %vm1327, %v1328, %v1287
      %v1330 = vshrl.u32 %v1329, 3
      %v1331 = vand.u32 %v1329, 7
      %v1332 = vsub.s32 0, %v1331
      %v1333 = vsel %vm1327, %v1332, %v1331
      %vm1334 = vcmp.lt.s32.totalorder %v1288, 0
      %v1335 = vsub.s32 0, %v1288
      %v1336 = vsel %vm1334, %v1335, %v1288
      %v1337 = vshrl.u32 %v1336, 3
      %v1338 = vand.u32 %v1336, 7
      %v1339 = vsub.s32 0, %v1338
      %v1340 = vsel %vm1334, %v1339, %v1338
      %vm1341 = vcmp.lt.s32.totalorder %v1289, 0
      %v1342 = vsub.s32 0, %v1289
      %v1343 = vsel %vm1341, %v1342, %v1289
      %v1344 = vshrl.u32 %v1343, 3
      %v1345 = vand.u32 %v1343, 7
      %v1346 = vsub.s32 0, %v1345
      %v1347 = vsel %vm1341, %v1346, %v1345
      %vm1348 = vcmp.lt.s32.totalorder %v1290, 0
      %v1349 = vsub.s32 0, %v1290
      %v1350 = vsel %vm1348, %v1349, %v1290
      %v1351 = vshrl.u32 %v1350, 3
      %v1352 = vand.u32 %v1350, 7
      %v1353 = vsub.s32 0, %v1352
      %v1354 = vsel %vm1348, %v1353, %v1352
      %vm1355 = vcmp.lt.s32.totalorder %v1291, 0
      %v1356 = vsub.s32 0, %v1291
      %v1357 = vsel %vm1355, %v1356, %v1291
      %v1358 = vshrl.u32 %v1357, 3
      %v1359 = vand.u32 %v1357, 7
      %v1360 = vsub.s32 0, %v1359
      %v1361 = vsel %vm1355, %v1360, %v1359
      %vm1362 = vcmp.lt.s32.totalorder %v1292, 0
      %v1363 = vsub.s32 0, %v1292
      %v1364 = vsel %vm1362, %v1363, %v1292
      %v1365 = vshrl.u32 %v1364, 3
      %v1366 = vand.u32 %v1364, 7
      %v1367 = vsub.s32 0, %v1366
      %v1368 = vsel %vm1362, %v1367, %v1366
      %vm1369 = vcmp.lt.s32.totalorder %v1293, 0
      %v1370 = vsub.s32 0, %v1293
      %v1371 = vsel %vm1369, %v1370, %v1293
      %v1372 = vshrl.u32 %v1371, 3
      %v1373 = vand.u32 %v1371, 7
      %v1374 = vsub.s32 0, %v1373
      %v1375 = vsel %vm1369, %v1374, %v1373
      %vm1376 = vcmp.lt.s32.totalorder %v1294, 0
      %v1377 = vsub.s32 0, %v1294
      %v1378 = vsel %vm1376, %v1377, %v1294
      %v1379 = vshrl.u32 %v1378, 3
      %v1380 = vand.u32 %v1378, 7
      %v1381 = vsub.s32 0, %v1380
      %v1382 = vsel %vm1376, %v1381, %v1380
      %vm1383 = vcmp.lt.s32.totalorder %v1295, 0
      %v1384 = vsub.s32 0, %v1295
      %v1385 = vsel %vm1383, %v1384, %v1295
      %v1386 = vshrl.u32 %v1385, 3
      %v1387 = vand.u32 %v1385, 7
      %v1388 = vsub.s32 0, %v1387
      %v1389 = vsel %vm1383, %v1388, %v1387
      %vm1390 = vcmp.lt.s32.totalorder %v1296, 0
      %v1391 = vsub.s32 0, %v1296
      %v1392 = vsel %vm1390, %v1391, %v1296
      %v1393 = vshrl.u32 %v1392, 3
      %v1394 = vand.u32 %v1392, 7
      %v1395 = vsub.s32 0, %v1394
      %v1396 = vsel %vm1390, %v1395, %v1394
      %vm1397 = vcmp.lt.s32.totalorder %v1297, 0
      %v1398 = vsub.s32 0, %v1297
      %v1399 = vsel %vm1397, %v1398, %v1297
      %v1400 = vshrl.u32 %v1399, 3
      %v1401 = vand.u32 %v1399, 7
      %v1402 = vsub.s32 0, %v1401
      %v1403 = vsel %vm1397, %v1402, %v1401
      %vm1404 = vcmp.lt.s32.totalorder %v1298, 0
      %v1405 = vsub.s32 0, %v1298
      %v1406 = vsel %vm1404, %v1405, %v1298
      %v1407 = vshrl.u32 %v1406, 3
      %v1408 = vand.u32 %v1406, 7
      %v1409 = vsub.s32 0, %v1408
      %v1410 = vsel %vm1404, %v1409, %v1408
      %vm1411 = vcmp.ne.s32.totalorder %v1305, 0
      %vm1412 = vcmp.ne.s32.totalorder %v1312, 0
      %vm1413 = vcmp.ne.s32.totalorder %v1319, 0
      %vm1414 = vcmp.ne.s32.totalorder %v1326, 0
      %vm1415 = vcmp.ne.s32.totalorder %v1333, 0
      %vm1416 = vcmp.ne.s32.totalorder %v1340, 0
      %vm1417 = vcmp.ne.s32.totalorder %v1347, 0
      %vm1418 = vcmp.ne.s32.totalorder %v1354, 0
      %vm1419 = vcmp.ne.s32.totalorder %v1361, 0
      %vm1420 = vcmp.ne.s32.totalorder %v1368, 0
      %vm1421 = vcmp.ne.s32.totalorder %v1375, 0
      %vm1422 = vcmp.ne.s32.totalorder %v1382, 0
      %vm1423 = vcmp.ne.s32.totalorder %v1389, 0
      %vm1424 = vcmp.ne.s32.totalorder %v1396, 0
      %vm1425 = vcmp.ne.s32.totalorder %v1403, 0
      %vm1426 = vcmp.ne.s32.totalorder %v1410, 0
      %vm1427 = vcmp.lt.s32.totalorder %v1305, 0
      %vm1428 = vcmp.lt.s32.totalorder %v1312, 0
      %vm1429 = vcmp.lt.s32.totalorder %v1319, 0
      %vm1430 = vcmp.lt.s32.totalorder %v1326, 0
      %vm1431 = vcmp.lt.s32.totalorder %v1333, 0
      %vm1432 = vcmp.lt.s32.totalorder %v1340, 0
      %vm1433 = vcmp.lt.s32.totalorder %v1347, 0
      %vm1434 = vcmp.lt.s32.totalorder %v1354, 0
      %vm1435 = vcmp.lt.s32.totalorder %v1361, 0
      %vm1436 = vcmp.lt.s32.totalorder %v1368, 0
      %vm1437 = vcmp.lt.s32.totalorder %v1375, 0
      %vm1438 = vcmp.lt.s32.totalorder %v1382, 0
      %vm1439 = vcmp.lt.s32.totalorder %v1389, 0
      %vm1440 = vcmp.lt.s32.totalorder %v1396, 0
      %vm1441 = vcmp.lt.s32.totalorder %v1403, 0
      %vm1442 = vcmp.lt.s32.totalorder %v1410, 0
      %vm1443 = vmand %vm1427, %vm1411
      %vm1444 = vmand %vm1428, %vm1412
      %vm1445 = vmand %vm1429, %vm1413
      %vm1446 = vmand %vm1430, %vm1414
      %vm1447 = vmand %vm1431, %vm1415
      %vm1448 = vmand %vm1432, %vm1416
      %vm1449 = vmand %vm1433, %vm1417
      %vm1450 = vmand %vm1434, %vm1418
      %vm1451 = vmand %vm1435, %vm1419
      %vm1452 = vmand %vm1436, %vm1420
      %vm1453 = vmand %vm1437, %vm1421
      %vm1454 = vmand %vm1438, %vm1422
      %vm1455 = vmand %vm1439, %vm1423
      %vm1456 = vmand %vm1440, %vm1424
      %vm1457 = vmand %vm1441, %vm1425
      %vm1458 = vmand %vm1442, %vm1426
      %v1459 = vadd.s32 %v1305, 8
      %v1460 = vadd.s32 %v1312, 8
      %v1461 = vadd.s32 %v1319, 8
      %v1462 = vadd.s32 %v1326, 8
      %v1463 = vadd.s32 %v1333, 8
      %v1464 = vadd.s32 %v1340, 8
      %v1465 = vadd.s32 %v1347, 8
      %v1466 = vadd.s32 %v1354, 8
      %v1467 = vadd.s32 %v1361, 8
      %v1468 = vadd.s32 %v1368, 8
      %v1469 = vadd.s32 %v1375, 8
      %v1470 = vadd.s32 %v1382, 8
      %v1471 = vadd.s32 %v1389, 8
      %v1472 = vadd.s32 %v1396, 8
      %v1473 = vadd.s32 %v1403, 8
      %v1474 = vadd.s32 %v1410, 8
      %v1475 = vsel %vm1443, %v1459, %v1305
      %v1476 = vsel %vm1444, %v1460, %v1312
      %v1477 = vsel %vm1445, %v1461, %v1319
      %v1478 = vsel %vm1446, %v1462, %v1326
      %v1479 = vsel %vm1447, %v1463, %v1333
      %v1480 = vsel %vm1448, %v1464, %v1340
      %v1481 = vsel %vm1449, %v1465, %v1347
      %v1482 = vsel %vm1450, %v1466, %v1354
      %v1483 = vsel %vm1451, %v1467, %v1361
      %v1484 = vsel %vm1452, %v1468, %v1368
      %v1485 = vsel %vm1453, %v1469, %v1375
      %v1486 = vsel %vm1454, %v1470, %v1382
      %v1487 = vsel %vm1455, %v1471, %v1389
      %v1488 = vsel %vm1456, %v1472, %v1396
      %v1489 = vsel %vm1457, %v1473, %v1403
      %v1490 = vsel %vm1458, %v1474, %v1410
      %v1491 = vlaneseq
      %v1492 = vand.u32 %v1491, 127
      %vm1493 = vcmp.lt.s32.totalorder %v1492, 0
      %v1494 = vsub.s32 0, %v1492
      %v1495 = vsel %vm1493, %v1494, %v1492
      %v1496 = vshrl.u32 %v1495, 3
      %v1497 = vand.u32 %v1495, 7
      %v1498 = vsub.s32 0, %v1497
      %v1499 = vsel %vm1493, %v1498, %v1497
      %vm1500 = vcmp.ne.s32.totalorder %v1499, 0
      %vm1501 = vcmp.lt.s32.totalorder %v1499, 0
      %vm1502 = vmand %vm1501, %vm1500
      %v1503 = vadd.s32 %v1499, 8
      %v1504 = vsel %vm1502, %v1503, %v1499
      %vm1505 = vcmp.eq.s32.totalorder %v1475, %v1504
      %vm1506 = vcmp.eq.s32.totalorder %v1476, %v1504
      %vm1507 = vcmp.eq.s32.totalorder %v1477, %v1504
      %vm1508 = vcmp.eq.s32.totalorder %v1478, %v1504
      %vm1509 = vcmp.eq.s32.totalorder %v1479, %v1504
      %vm1510 = vcmp.eq.s32.totalorder %v1480, %v1504
      %vm1511 = vcmp.eq.s32.totalorder %v1481, %v1504
      %vm1512 = vcmp.eq.s32.totalorder %v1482, %v1504
      %vm1513 = vcmp.eq.s32.totalorder %v1483, %v1504
      %vm1514 = vcmp.eq.s32.totalorder %v1484, %v1504
      %vm1515 = vcmp.eq.s32.totalorder %v1485, %v1504
      %vm1516 = vcmp.eq.s32.totalorder %v1486, %v1504
      %vm1517 = vcmp.eq.s32.totalorder %v1487, %v1504
      %vm1518 = vcmp.eq.s32.totalorder %v1488, %v1504
      %vm1519 = vcmp.eq.s32.totalorder %v1489, %v1504
      %vm1520 = vcmp.eq.s32.totalorder %v1490, %v1504
      %v1521 = vsel %vm1505, %v1266, -1e+30
      %v1522 = vsel %vm1506, %v1267, -1e+30
      %v1523 = vsel %vm1507, %v1268, -1e+30
      %v1524 = vsel %vm1508, %v1269, -1e+30
      %v1525 = vsel %vm1509, %v1270, -1e+30
      %v1526 = vsel %vm1510, %v1271, -1e+30
      %v1527 = vsel %vm1511, %v1272, -1e+30
      %v1528 = vsel %vm1512, %v1273, -1e+30
      %v1529 = vsel %vm1513, %v1274, -1e+30
      %v1530 = vsel %vm1514, %v1275, -1e+30
      %v1531 = vsel %vm1515, %v1276, -1e+30
      %v1532 = vsel %vm1516, %v1277, -1e+30
      %v1533 = vsel %vm1517, %v1278, -1e+30
      %v1534 = vsel %vm1518, %v1279, -1e+30
      %v1535 = vsel %vm1519, %v1280, -1e+30
      %v1536 = vsel %vm1520, %v1281, -1e+30
      %1537 = vmax.xlane.f32.xlu0 %v1521
      %v1538 = vpop.xlane.xlu0 %1537
      %1539 = vmax.xlane.f32.xlu0 %v1522
      %v1540 = vpop.xlane.xlu0 %1539
      %1541 = vmax.xlane.f32.xlu0 %v1523
      %v1542 = vpop.xlane.xlu0 %1541
      %1543 = vmax.xlane.f32.xlu0 %v1524
      %v1544 = vpop.xlane.xlu0 %1543
      %1545 = vmax.xlane.f32.xlu0 %v1525
      %v1546 = vpop.xlane.xlu0 %1545
      %1547 = vmax.xlane.f32.xlu0 %v1526
      %v1548 = vpop.xlane.xlu0 %1547
      %1549 = vmax.xlane.f32.xlu0 %v1527
      %v1550 = vpop.xlane.xlu0 %1549
      %1551 = vmax.xlane.f32.xlu0 %v1528
      %v1552 = vpop.xlane.xlu0 %1551
      %1553 = vmax.xlane.f32.xlu0 %v1529
      %v1554 = vpop.xlane.xlu0 %1553
      %1555 = vmax.xlane.f32.xlu0 %v1530
      %v1556 = vpop.xlane.xlu0 %1555
      %1557 = vmax.xlane.f32.xlu0 %v1531
      %v1558 = vpop.xlane.xlu0 %1557
      %1559 = vmax.xlane.f32.xlu0 %v1532
      %v1560 = vpop.xlane.xlu0 %1559
      %1561 = vmax.xlane.f32.xlu0 %v1533
      %v1562 = vpop.xlane.xlu0 %1561
      %1563 = vmax.xlane.f32.xlu0 %v1534
      %v1564 = vpop.xlane.xlu0 %1563
      %1565 = vmax.xlane.f32.xlu0 %v1535
      %v1566 = vpop.xlane.xlu0 %1565
      %1567 = vmax.xlane.f32.xlu0 %v1536
      %v1568 = vpop.xlane.xlu0 %1567
      %v1569 = vsub.f32 %v1521, %v1538
      %v1570 = vsub.f32 %v1522, %v1540
      %v1571 = vsub.f32 %v1523, %v1542
      %v1572 = vsub.f32 %v1524, %v1544
      %v1573 = vsub.f32 %v1525, %v1546
      %v1574 = vsub.f32 %v1526, %v1548
      %v1575 = vsub.f32 %v1527, %v1550
      %v1576 = vsub.f32 %v1528, %v1552
      %v1577 = vsub.f32 %v1529, %v1554
      %v1578 = vsub.f32 %v1530, %v1556
      %v1579 = vsub.f32 %v1531, %v1558
      %v1580 = vsub.f32 %v1532, %v1560
      %v1581 = vsub.f32 %v1533, %v1562
      %v1582 = vsub.f32 %v1534, %v1564
      %v1583 = vsub.f32 %v1535, %v1566
      %v1584 = vsub.f32 %v1536, %v1568
      %v1585 = vmul.f32 %v1569, 1.442695
      %v1586 = vpow.pop %v1585
      %v1587 = vmul.f32 %v1570, 1.442695
      %v1588 = vpow.pop %v1587
      %v1589 = vmul.f32 %v1571, 1.442695
      %v1590 = vpow.pop %v1589
      %v1591 = vmul.f32 %v1572, 1.442695
      %v1592 = vpow.pop %v1591
      %v1593 = vmul.f32 %v1573, 1.442695
      %v1594 = vpow.pop %v1593
      %v1595 = vmul.f32 %v1574, 1.442695
      %v1596 = vpow.pop %v1595
      %v1597 = vmul.f32 %v1575, 1.442695
      %v1598 = vpow.pop %v1597
      %v1599 = vmul.f32 %v1576, 1.442695
      %v1600 = vpow.pop %v1599
      %v1601 = vmul.f32 %v1577, 1.442695
      %v1602 = vpow.pop %v1601
      %v1603 = vmul.f32 %v1578, 1.442695
      %v1604 = vpow.pop %v1603
      %v1605 = vmul.f32 %v1579, 1.442695
      %v1606 = vpow.pop %v1605
      %v1607 = vmul.f32 %v1580, 1.442695
      %v1608 = vpow.pop %v1607
      %v1609 = vmul.f32 %v1581, 1.442695
      %v1610 = vpow.pop %v1609
      %v1611 = vmul.f32 %v1582, 1.442695
      %v1612 = vpow.pop %v1611
      %v1613 = vmul.f32 %v1583, 1.442695
      %v1614 = vpow.pop %v1613
      %v1615 = vmul.f32 %v1584, 1.442695
      %v1616 = vpow.pop %v1615
      %1617 = vadd.xlane.f32.xlu0 %v1586
      %v1618 = vpop.xlane.xlu0 %1617
      %1619 = vadd.xlane.f32.xlu0 %v1588
      %v1620 = vpop.xlane.xlu0 %1619
      %1621 = vadd.xlane.f32.xlu0 %v1590
      %v1622 = vpop.xlane.xlu0 %1621
      %1623 = vadd.xlane.f32.xlu0 %v1592
      %v1624 = vpop.xlane.xlu0 %1623
      %1625 = vadd.xlane.f32.xlu0 %v1594
      %v1626 = vpop.xlane.xlu0 %1625
      %1627 = vadd.xlane.f32.xlu0 %v1596
      %v1628 = vpop.xlane.xlu0 %1627
      %1629 = vadd.xlane.f32.xlu0 %v1598
      %v1630 = vpop.xlane.xlu0 %1629
      %1631 = vadd.xlane.f32.xlu0 %v1600
      %v1632 = vpop.xlane.xlu0 %1631
      %1633 = vadd.xlane.f32.xlu0 %v1602
      %v1634 = vpop.xlane.xlu0 %1633
      %1635 = vadd.xlane.f32.xlu0 %v1604
      %v1636 = vpop.xlane.xlu0 %1635
      %1637 = vadd.xlane.f32.xlu0 %v1606
      %v1638 = vpop.xlane.xlu0 %1637
      %1639 = vadd.xlane.f32.xlu0 %v1608
      %v1640 = vpop.xlane.xlu0 %1639
      %1641 = vadd.xlane.f32.xlu0 %v1610
      %v1642 = vpop.xlane.xlu0 %1641
      %1643 = vadd.xlane.f32.xlu0 %v1612
      %v1644 = vpop.xlane.xlu0 %1643
      %1645 = vadd.xlane.f32.xlu0 %v1614
      %v1646 = vpop.xlane.xlu0 %1645
      %1647 = vadd.xlane.f32.xlu0 %v1616
      %v1648 = vpop.xlane.xlu0 %1647
      %v1649 = vrcp.pop %v1618
      %v1650 = vmul.f32 %v1618, %v1649
      %v1651 = vsub.f32 1.0, %v1650
      %v1652 = vmul.f32 %v1649, %v1651
      %v1653 = vadd.f32 %v1649, %v1652
      %vm1654 = vweird.f32 %v1618
      %vm1655 = vweird.f32 %v1649
      %vm1656 = vmor %vm1654, %vm1655
      %v1657 = vsel %vm1656, %v1649, %v1653
      %v1658 = vand.u32 2147483647, %v1618
      %vm1659 = vcmp.eq.f32.partialorder %v1658, 8.507059e+37
      %v1660 = vand.u32 %v1618, 2147483648
      %v1661 = vor.u32 1.1754944e-38, %v1660
      %v1662 = vsel %vm1659, %v1661, %v1657
      %v1663 = vmul.f32 %v1586, %v1662
      %v1664 = vrcp.pop %v1620
      %v1665 = vmul.f32 %v1620, %v1664
      %v1666 = vsub.f32 1.0, %v1665
      %v1667 = vmul.f32 %v1664, %v1666
      %v1668 = vadd.f32 %v1664, %v1667
      %vm1669 = vweird.f32 %v1620
      %vm1670 = vweird.f32 %v1664
      %vm1671 = vmor %vm1669, %vm1670
      %v1672 = vsel %vm1671, %v1664, %v1668
      %v1673 = vand.u32 2147483647, %v1620
      %vm1674 = vcmp.eq.f32.partialorder %v1673, 8.507059e+37
      %v1675 = vand.u32 %v1620, 2147483648
      %v1676 = vor.u32 1.1754944e-38, %v1675
      %v1677 = vsel %vm1674, %v1676, %v1672
      %v1678 = vmul.f32 %v1588, %v1677
      %v1679 = vrcp.pop %v1622
      %v1680 = vmul.f32 %v1622, %v1679
      %v1681 = vsub.f32 1.0, %v1680
      %v1682 = vmul.f32 %v1679, %v1681
      %v1683 = vadd.f32 %v1679, %v1682
      %vm1684 = vweird.f32 %v1622
      %vm1685 = vweird.f32 %v1679
      %vm1686 = vmor %vm1684, %vm1685
      %v1687 = vsel %vm1686, %v1679, %v1683
      %v1688 = vand.u32 2147483647, %v1622
      %vm1689 = vcmp.eq.f32.partialorder %v1688, 8.507059e+37
      %v1690 = vand.u32 %v1622, 2147483648
      %v1691 = vor.u32 1.1754944e-38, %v1690
      %v1692 = vsel %vm1689, %v1691, %v1687
      %v1693 = vmul.f32 %v1590, %v1692
      %v1694 = vrcp.pop %v1624
      %v1695 = vmul.f32 %v1624, %v1694
      %v1696 = vsub.f32 1.0, %v1695
      %v1697 = vmul.f32 %v1694, %v1696
      %v1698 = vadd.f32 %v1694, %v1697
      %vm1699 = vweird.f32 %v1624
      %vm1700 = vweird.f32 %v1694
      %vm1701 = vmor %vm1699, %vm1700
      %v1702 = vsel %vm1701, %v1694, %v1698
      %v1703 = vand.u32 2147483647, %v1624
      %vm1704 = vcmp.eq.f32.partialorder %v1703, 8.507059e+37
      %v1705 = vand.u32 %v1624, 2147483648
      %v1706 = vor.u32 1.1754944e-38, %v1705
      %v1707 = vsel %vm1704, %v1706, %v1702
      %v1708 = vmul.f32 %v1592, %v1707
      %v1709 = vrcp.pop %v1626
      %v1710 = vmul.f32 %v1626, %v1709
      %v1711 = vsub.f32 1.0, %v1710
      %v1712 = vmul.f32 %v1709, %v1711
      %v1713 = vadd.f32 %v1709, %v1712
      %vm1714 = vweird.f32 %v1626
      %vm1715 = vweird.f32 %v1709
      %vm1716 = vmor %vm1714, %vm1715
      %v1717 = vsel %vm1716, %v1709, %v1713
      %v1718 = vand.u32 2147483647, %v1626
      %vm1719 = vcmp.eq.f32.partialorder %v1718, 8.507059e+37
      %v1720 = vand.u32 %v1626, 2147483648
      %v1721 = vor.u32 1.1754944e-38, %v1720
      %v1722 = vsel %vm1719, %v1721, %v1717
      %v1723 = vmul.f32 %v1594, %v1722
      %v1724 = vrcp.pop %v1628
      %v1725 = vmul.f32 %v1628, %v1724
      %v1726 = vsub.f32 1.0, %v1725
      %v1727 = vmul.f32 %v1724, %v1726
      %v1728 = vadd.f32 %v1724, %v1727
      %vm1729 = vweird.f32 %v1628
      %vm1730 = vweird.f32 %v1724
      %vm1731 = vmor %vm1729, %vm1730
      %v1732 = vsel %vm1731, %v1724, %v1728
      %v1733 = vand.u32 2147483647, %v1628
      %vm1734 = vcmp.eq.f32.partialorder %v1733, 8.507059e+37
      %v1735 = vand.u32 %v1628, 2147483648
      %v1736 = vor.u32 1.1754944e-38, %v1735
      %v1737 = vsel %vm1734, %v1736, %v1732
      %v1738 = vmul.f32 %v1596, %v1737
      %v1739 = vrcp.pop %v1630
      %v1740 = vmul.f32 %v1630, %v1739
      %v1741 = vsub.f32 1.0, %v1740
      %v1742 = vmul.f32 %v1739, %v1741
      %v1743 = vadd.f32 %v1739, %v1742
      %vm1744 = vweird.f32 %v1630
      %vm1745 = vweird.f32 %v1739
      %vm1746 = vmor %vm1744, %vm1745
      %v1747 = vsel %vm1746, %v1739, %v1743
      %v1748 = vand.u32 2147483647, %v1630
      %vm1749 = vcmp.eq.f32.partialorder %v1748, 8.507059e+37
      %v1750 = vand.u32 %v1630, 2147483648
      %v1751 = vor.u32 1.1754944e-38, %v1750
      %v1752 = vsel %vm1749, %v1751, %v1747
      %v1753 = vmul.f32 %v1598, %v1752
      %v1754 = vrcp.pop %v1632
      %v1755 = vmul.f32 %v1632, %v1754
      %v1756 = vsub.f32 1.0, %v1755
      %v1757 = vmul.f32 %v1754, %v1756
      %v1758 = vadd.f32 %v1754, %v1757
      %vm1759 = vweird.f32 %v1632
      %vm1760 = vweird.f32 %v1754
      %vm1761 = vmor %vm1759, %vm1760
      %v1762 = vsel %vm1761, %v1754, %v1758
      %v1763 = vand.u32 2147483647, %v1632
      %vm1764 = vcmp.eq.f32.partialorder %v1763, 8.507059e+37
      %v1765 = vand.u32 %v1632, 2147483648
      %v1766 = vor.u32 1.1754944e-38, %v1765
      %v1767 = vsel %vm1764, %v1766, %v1762
      %v1768 = vmul.f32 %v1600, %v1767
      %v1769 = vrcp.pop %v1634
      %v1770 = vmul.f32 %v1634, %v1769
      %v1771 = vsub.f32 1.0, %v1770
      %v1772 = vmul.f32 %v1769, %v1771
      %v1773 = vadd.f32 %v1769, %v1772
      %vm1774 = vweird.f32 %v1634
      %vm1775 = vweird.f32 %v1769
      %vm1776 = vmor %vm1774, %vm1775
      %v1777 = vsel %vm1776, %v1769, %v1773
      %v1778 = vand.u32 2147483647, %v1634
      %vm1779 = vcmp.eq.f32.partialorder %v1778, 8.507059e+37
      %v1780 = vand.u32 %v1634, 2147483648
      %v1781 = vor.u32 1.1754944e-38, %v1780
      %v1782 = vsel %vm1779, %v1781, %v1777
      %v1783 = vmul.f32 %v1602, %v1782
      %v1784 = vrcp.pop %v1636
      %v1785 = vmul.f32 %v1636, %v1784
      %v1786 = vsub.f32 1.0, %v1785
      %v1787 = vmul.f32 %v1784, %v1786
      %v1788 = vadd.f32 %v1784, %v1787
      %vm1789 = vweird.f32 %v1636
      %vm1790 = vweird.f32 %v1784
      %vm1791 = vmor %vm1789, %vm1790
      %v1792 = vsel %vm1791, %v1784, %v1788
      %v1793 = vand.u32 2147483647, %v1636
      %vm1794 = vcmp.eq.f32.partialorder %v1793, 8.507059e+37
      %v1795 = vand.u32 %v1636, 2147483648
      %v1796 = vor.u32 1.1754944e-38, %v1795
      %v1797 = vsel %vm1794, %v1796, %v1792
      %v1798 = vmul.f32 %v1604, %v1797
      %v1799 = vrcp.pop %v1638
      %v1800 = vmul.f32 %v1638, %v1799
      %v1801 = vsub.f32 1.0, %v1800
      %v1802 = vmul.f32 %v1799, %v1801
      %v1803 = vadd.f32 %v1799, %v1802
      %vm1804 = vweird.f32 %v1638
      %vm1805 = vweird.f32 %v1799
      %vm1806 = vmor %vm1804, %vm1805
      %v1807 = vsel %vm1806, %v1799, %v1803
      %v1808 = vand.u32 2147483647, %v1638
      %vm1809 = vcmp.eq.f32.partialorder %v1808, 8.507059e+37
      %v1810 = vand.u32 %v1638, 2147483648
      %v1811 = vor.u32 1.1754944e-38, %v1810
      %v1812 = vsel %vm1809, %v1811, %v1807
      %v1813 = vmul.f32 %v1606, %v1812
      %v1814 = vrcp.pop %v1640
      %v1815 = vmul.f32 %v1640, %v1814
      %v1816 = vsub.f32 1.0, %v1815
      %v1817 = vmul.f32 %v1814, %v1816
      %v1818 = vadd.f32 %v1814, %v1817
      %vm1819 = vweird.f32 %v1640
      %vm1820 = vweird.f32 %v1814
      %vm1821 = vmor %vm1819, %vm1820
      %v1822 = vsel %vm1821, %v1814, %v1818
      %v1823 = vand.u32 2147483647, %v1640
      %vm1824 = vcmp.eq.f32.partialorder %v1823, 8.507059e+37
      %v1825 = vand.u32 %v1640, 2147483648
      %v1826 = vor.u32 1.1754944e-38, %v1825
      %v1827 = vsel %vm1824, %v1826, %v1822
      %v1828 = vmul.f32 %v1608, %v1827
      %v1829 = vrcp.pop %v1642
      %v1830 = vmul.f32 %v1642, %v1829
      %v1831 = vsub.f32 1.0, %v1830
      %v1832 = vmul.f32 %v1829, %v1831
      %v1833 = vadd.f32 %v1829, %v1832
      %vm1834 = vweird.f32 %v1642
      %vm1835 = vweird.f32 %v1829
      %vm1836 = vmor %vm1834, %vm1835
      %v1837 = vsel %vm1836, %v1829, %v1833
      %v1838 = vand.u32 2147483647, %v1642
      %vm1839 = vcmp.eq.f32.partialorder %v1838, 8.507059e+37
      %v1840 = vand.u32 %v1642, 2147483648
      %v1841 = vor.u32 1.1754944e-38, %v1840
      %v1842 = vsel %vm1839, %v1841, %v1837
      %v1843 = vmul.f32 %v1610, %v1842
      %v1844 = vrcp.pop %v1644
      %v1845 = vmul.f32 %v1644, %v1844
      %v1846 = vsub.f32 1.0, %v1845
      %v1847 = vmul.f32 %v1844, %v1846
      %v1848 = vadd.f32 %v1844, %v1847
      %vm1849 = vweird.f32 %v1644
      %vm1850 = vweird.f32 %v1844
      %vm1851 = vmor %vm1849, %vm1850
      %v1852 = vsel %vm1851, %v1844, %v1848
      %v1853 = vand.u32 2147483647, %v1644
      %vm1854 = vcmp.eq.f32.partialorder %v1853, 8.507059e+37
      %v1855 = vand.u32 %v1644, 2147483648
      %v1856 = vor.u32 1.1754944e-38, %v1855
      %v1857 = vsel %vm1854, %v1856, %v1852
      %v1858 = vmul.f32 %v1612, %v1857
      %v1859 = vrcp.pop %v1646
      %v1860 = vmul.f32 %v1646, %v1859
      %v1861 = vsub.f32 1.0, %v1860
      %v1862 = vmul.f32 %v1859, %v1861
      %v1863 = vadd.f32 %v1859, %v1862
      %vm1864 = vweird.f32 %v1646
      %vm1865 = vweird.f32 %v1859
      %vm1866 = vmor %vm1864, %vm1865
      %v1867 = vsel %vm1866, %v1859, %v1863
      %v1868 = vand.u32 2147483647, %v1646
      %vm1869 = vcmp.eq.f32.partialorder %v1868, 8.507059e+37
      %v1870 = vand.u32 %v1646, 2147483648
      %v1871 = vor.u32 1.1754944e-38, %v1870
      %v1872 = vsel %vm1869, %v1871, %v1867
      %v1873 = vmul.f32 %v1614, %v1872
      %v1874 = vrcp.pop %v1648
      %v1875 = vmul.f32 %v1648, %v1874
      %v1876 = vsub.f32 1.0, %v1875
      %v1877 = vmul.f32 %v1874, %v1876
      %v1878 = vadd.f32 %v1874, %v1877
      %vm1879 = vweird.f32 %v1648
      %vm1880 = vweird.f32 %v1874
      %vm1881 = vmor %vm1879, %vm1880
      %v1882 = vsel %vm1881, %v1874, %v1878
      %v1883 = vand.u32 2147483647, %v1648
      %vm1884 = vcmp.eq.f32.partialorder %v1883, 8.507059e+37
      %v1885 = vand.u32 %v1648, 2147483648
      %v1886 = vor.u32 1.1754944e-38, %v1885
      %v1887 = vsel %vm1884, %v1886, %v1882
      %v1888 = vmul.f32 %v1616, %v1887
      %v1889 = vld [vmem:[%s2] sm:$0xff]
      %v1890 = vld [vmem:[%s2 + $0x8] sm:$0xff]
      %v1891 = vld [vmem:[%s2 + $0x10] sm:$0xff]
      %v1892 = vld [vmem:[%s2 + $0x18] sm:$0xff]
      %v1893 = vld [vmem:[%s2 + $0x20] sm:$0xff]
      %v1894 = vld [vmem:[%s2 + $0x28] sm:$0xff]
      %v1895 = vld [vmem:[%s2 + $0x30] sm:$0xff]
      %v1896 = vld [vmem:[%s2 + $0x38] sm:$0xff]
      %v1897 = vld [vmem:[%s2 + $0x40] sm:$0xff]
      %v1898 = vld [vmem:[%s2 + $0x48] sm:$0xff]
      %v1899 = vld [vmem:[%s2 + $0x50] sm:$0xff]
      %v1900 = vld [vmem:[%s2 + $0x58] sm:$0xff]
      %v1901 = vld [vmem:[%s2 + $0x60] sm:$0xff]
      %v1902 = vld [vmem:[%s2 + $0x68] sm:$0xff]
      %v1903 = vld [vmem:[%s2 + $0x70] sm:$0xff]
      %v1904 = vld [vmem:[%s2 + $0x78] sm:$0xff]
      %v1905 = vmul.f32 %v1889, %v1663
      %v1906 = vmul.f32 %v1890, %v1678
      %v1907 = vmul.f32 %v1891, %v1693
      %v1908 = vmul.f32 %v1892, %v1708
      %v1909 = vmul.f32 %v1893, %v1723
      %v1910 = vmul.f32 %v1894, %v1738
      %v1911 = vmul.f32 %v1895, %v1753
      %v1912 = vmul.f32 %v1896, %v1768
      %v1913 = vmul.f32 %v1897, %v1783
      %v1914 = vmul.f32 %v1898, %v1798
      %v1915 = vmul.f32 %v1899, %v1813
      %v1916 = vmul.f32 %v1900, %v1828
      %v1917 = vmul.f32 %v1901, %v1843
      %v1918 = vmul.f32 %v1902, %v1858
      %v1919 = vmul.f32 %v1903, %v1873
      %v1920 = vmul.f32 %v1904, %v1888
      %v1921 = vpack.c.bf16 %v1906, %v1905
      %v1922 = vpack.c.bf16 %v1908, %v1907
      %v1923 = vpack.c.bf16 %v1910, %v1909
      %v1924 = vpack.c.bf16 %v1912, %v1911
      %v1925 = vpack.c.bf16 %v1914, %v1913
      %v1926 = vpack.c.bf16 %v1916, %v1915
      %v1927 = vpack.c.bf16 %v1918, %v1917
      %v1928 = vpack.c.bf16 %v1920, %v1919
      %v1929 = vld [vmem:[%s3] sm:$0xff]
      %v1930 = vld [vmem:[%s3 + $0x8] sm:$0xff]
      %v1931 = vld [vmem:[%s3 + $0x10] sm:$0xff]
      %v1932 = vld [vmem:[%s3 + $0x18] sm:$0xff]
      %v1933 = vld [vmem:[%s3 + $0x20] sm:$0xff]
      %v1934 = vld [vmem:[%s3 + $0x28] sm:$0xff]
      %v1935 = vld [vmem:[%s3 + $0x30] sm:$0xff]
      %v1936 = vld [vmem:[%s3 + $0x38] sm:$0xff]
      %v1937 = vld [vmem:[%s3 + $0x40] sm:$0xff]
      %v1938 = vld [vmem:[%s3 + $0x48] sm:$0xff]
      %v1939 = vld [vmem:[%s3 + $0x50] sm:$0xff]
      %v1940 = vld [vmem:[%s3 + $0x58] sm:$0xff]
      %v1941 = vld [vmem:[%s3 + $0x60] sm:$0xff]
      %v1942 = vld [vmem:[%s3 + $0x68] sm:$0xff]
      %v1943 = vld [vmem:[%s3 + $0x70] sm:$0xff]
      %v1944 = vld [vmem:[%s3 + $0x78] sm:$0xff]
      %v1945 = vmul.f32 %v1929, %v1663
      %v1946 = vmul.f32 %v1930, %v1678
      %v1947 = vmul.f32 %v1931, %v1693
      %v1948 = vmul.f32 %v1932, %v1708
      %v1949 = vmul.f32 %v1933, %v1723
      %v1950 = vmul.f32 %v1934, %v1738
      %v1951 = vmul.f32 %v1935, %v1753
      %v1952 = vmul.f32 %v1936, %v1768
      %v1953 = vmul.f32 %v1937, %v1783
      %v1954 = vmul.f32 %v1938, %v1798
      %v1955 = vmul.f32 %v1939, %v1813
      %v1956 = vmul.f32 %v1940, %v1828
      %v1957 = vmul.f32 %v1941, %v1843
      %v1958 = vmul.f32 %v1942, %v1858
      %v1959 = vmul.f32 %v1943, %v1873
      %v1960 = vmul.f32 %v1944, %v1888
      %v1961 = vpack.c.bf16 %v1946, %v1945
      %v1962 = vpack.c.bf16 %v1948, %v1947
      %v1963 = vpack.c.bf16 %v1950, %v1949
      %v1964 = vpack.c.bf16 %v1952, %v1951
      %v1965 = vpack.c.bf16 %v1954, %v1953
      %v1966 = vpack.c.bf16 %v1956, %v1955
      %v1967 = vpack.c.bf16 %v1958, %v1957
      %v1968 = vpack.c.bf16 %v1960, %v1959
      %1969 = vmatpush.bf16.msra.mxu0 %v1168
      %1970 = vmatpush.bf16.msra.mxu0 %v1167
      %1971 = vmatpush.bf16.msra.mxu0 %v1166
      %1972 = vmatpush.bf16.msra.mxu0 %v1165
      %1973 = vmatpush.bf16.msra.mxu0 %v1164
      %1974 = vmatpush.bf16.msra.mxu0 %v1163
      %1975 = vmatpush.bf16.msra.mxu0 %v1162
      %1976 = vmatpush.bf16.msra.mxu0 %v1161
      %1977 = vmatmul.bf16.gmra.mxu0 %v1921
      %v1978 = vpop.f32.mrf.mxu0
      %v1979 = vadd.f32 0.0, %v1978
      %v1980 = vpop.f32.mrf.mxu0
      %v1981 = vadd.f32 0.0, %v1980
      %1982 = vmatmul.bf16.gmra.mxu0 %v1922
      %v1983 = vpop.f32.mrf.mxu0
      %v1984 = vadd.f32 0.0, %v1983
      %v1985 = vpop.f32.mrf.mxu0
      %v1986 = vadd.f32 0.0, %v1985
      %1987 = vmatmul.bf16.gmra.mxu0 %v1923
      %v1988 = vpop.f32.mrf.mxu0
      %v1989 = vadd.f32 0.0, %v1988
      %v1990 = vpop.f32.mrf.mxu0
      %v1991 = vadd.f32 0.0, %v1990
      %1992 = vmatmul.bf16.gmra.mxu0 %v1924
      %v1993 = vpop.f32.mrf.mxu0
      %v1994 = vadd.f32 0.0, %v1993
      %v1995 = vpop.f32.mrf.mxu0
      %v1996 = vadd.f32 0.0, %v1995
      %1997 = vmatmul.bf16.gmra.mxu0 %v1925
      %v1998 = vpop.f32.mrf.mxu0
      %v1999 = vadd.f32 0.0, %v1998
      %v2000 = vpop.f32.mrf.mxu0
      %v2001 = vadd.f32 0.0, %v2000
      %2002 = vmatmul.bf16.gmra.mxu0 %v1926
      %v2003 = vpop.f32.mrf.mxu0
      %v2004 = vadd.f32 0.0, %v2003
      %v2005 = vpop.f32.mrf.mxu0
      %v2006 = vadd.f32 0.0, %v2005
      %2007 = vmatmul.bf16.gmra.mxu0 %v1927
      %v2008 = vpop.f32.mrf.mxu0
      %v2009 = vadd.f32 0.0, %v2008
      %v2010 = vpop.f32.mrf.mxu0
      %v2011 = vadd.f32 0.0, %v2010
      %2012 = vmatmul.bf16.gmra.mxu0 %v1928
      %v2013 = vpop.f32.mrf.mxu0
      %v2014 = vadd.f32 0.0, %v2013
      %v2015 = vpop.f32.mrf.mxu0
      %v2016 = vadd.f32 0.0, %v2015
      %2017 = vdwg.mxu0
      %2018 = vxpose.xlu0.c.b16.start [1/8] %v1961, 128
      %2019 = vxpose.xlu0.c.b16.cont [2/8] %v1962, 128
      %2020 = vxpose.xlu0.c.b16.cont [3/8] %v1963, 128
      %2021 = vxpose.xlu0.c.b16.cont [4/8] %v1964, 128
      %2022 = vxpose.xlu0.c.b16.cont [5/8] %v1965, 128
      %2023 = vxpose.xlu0.c.b16.cont [6/8] %v1966, 128
      %2024 = vxpose.xlu0.c.b16.cont [7/8] %v1967, 128
      %2025 = vxpose.xlu0.c.b16.end [8/8] %v1968, 128
      %v2026 = vpop.trf.xlu0
      %v2027 = vpop.trf.xlu0
      %v2028 = vpop.trf.xlu0
      %v2029 = vpop.trf.xlu0
      %v2030 = vpop.trf.xlu0
      %v2031 = vpop.trf.xlu0
      %v2032 = vpop.trf.xlu0
      %v2033 = vpop.trf.xlu0
      %2034 = vmatpush.bf16.msra.mxu0 %v1160
      %2035 = vmatpush.bf16.msra.mxu0 %v1159
      %2036 = vmatpush.bf16.msra.mxu0 %v1158
      %2037 = vmatpush.bf16.msra.mxu0 %v1157
      %2038 = vmatpush.bf16.msra.mxu0 %v1156
      %2039 = vmatpush.bf16.msra.mxu0 %v1155
      %2040 = vmatpush.bf16.msra.mxu0 %v1154
      %2041 = vmatpush.bf16.msra.mxu0 %v1153
      %2042 = vmatmul.bf16.gmra.mxu0 %v2026
      %v2043 = vpop.f32.mrf.mxu0
      %v2044 = vadd.f32 0.0, %v2043
      %v2045 = vpop.f32.mrf.mxu0
      %v2046 = vadd.f32 0.0, %v2045
      %2047 = vmatmul.bf16.gmra.mxu0 %v2027
      %v2048 = vpop.f32.mrf.mxu0
      %v2049 = vadd.f32 0.0, %v2048
      %v2050 = vpop.f32.mrf.mxu0
      %v2051 = vadd.f32 0.0, %v2050
      %2052 = vmatmul.bf16.gmra.mxu0 %v2028
      %v2053 = vpop.f32.mrf.mxu0
      %v2054 = vadd.f32 0.0, %v2053
      %v2055 = vpop.f32.mrf.mxu0
      %v2056 = vadd.f32 0.0, %v2055
      %2057 = vmatmul.bf16.gmra.mxu0 %v2029
      %v2058 = vpop.f32.mrf.mxu0
      %v2059 = vadd.f32 0.0, %v2058
      %v2060 = vpop.f32.mrf.mxu0
      %v2061 = vadd.f32 0.0, %v2060
      %2062 = vmatmul.bf16.gmra.mxu0 %v2030
      %v2063 = vpop.f32.mrf.mxu0
      %v2064 = vadd.f32 0.0, %v2063
      %v2065 = vpop.f32.mrf.mxu0
      %v2066 = vadd.f32 0.0, %v2065
      %2067 = vmatmul.bf16.gmra.mxu0 %v2031
      %v2068 = vpop.f32.mrf.mxu0
      %v2069 = vadd.f32 0.0, %v2068
      %v2070 = vpop.f32.mrf.mxu0
      %v2071 = vadd.f32 0.0, %v2070
      %2072 = vmatmul.bf16.gmra.mxu0 %v2032
      %v2073 = vpop.f32.mrf.mxu0
      %v2074 = vadd.f32 0.0, %v2073
      %v2075 = vpop.f32.mrf.mxu0
      %v2076 = vadd.f32 0.0, %v2075
      %2077 = vmatmul.bf16.gmra.mxu0 %v2033
      %v2078 = vpop.f32.mrf.mxu0
      %v2079 = vadd.f32 0.0, %v2078
      %v2080 = vpop.f32.mrf.mxu0
      %v2081 = vadd.f32 0.0, %v2080
      %2082 = vdwg.mxu0
      %v2083 = vpack.c.bf16 %v1981, %v1979
      %v2084 = vpack.c.bf16 %v1986, %v1984
      %v2085 = vpack.c.bf16 %v1991, %v1989
      %v2086 = vpack.c.bf16 %v1996, %v1994
      %v2087 = vpack.c.bf16 %v2001, %v1999
      %v2088 = vpack.c.bf16 %v2006, %v2004
      %v2089 = vpack.c.bf16 %v2011, %v2009
      %v2090 = vpack.c.bf16 %v2016, %v2014
      %v2091 = vld [vmem:[%s4] sm:$0xf]
      %v2092 = vld [vmem:[%s4 + $0x4] sm:$0xf]
      %v2093 = vld [vmem:[%s4 + $0x8] sm:$0xf]
      %v2094 = vld [vmem:[%s4 + $0xc] sm:$0xf]
      %v2099 = vunpack.c.l.b16 %v2091
      %v2100 = vunpack.c.l.b16 %v2092
      %v2101 = vunpack.c.l.b16 %v2093
      %v2102 = vunpack.c.l.b16 %v2094
      %v2103 = vpack.c.b16 %v2100, %v2099
      %v2104 = vpack.c.b16 %v2102, %v2101
      %v2108 = vsel %vm357, %v2083, 0
      %v2111 = vsel %vm357, %v2084, 0
      %v2114 = vsel %vm357, %v2085, 0
      %v2117 = vsel %vm357, %v2086, 0
      %v2120 = vsel %vm357, %v2087, 0
      %v2123 = vsel %vm357, %v2088, 0
      %v2126 = vsel %vm357, %v2089, 0
      %v2129 = vsel %vm357, %v2090, 0
      %2131 = vmatpush.bf16.msra.mxu0 0
      %2132 = vmatpush.bf16.msra.mxu0 0
      %2133 = vmatpush.bf16.msra.mxu0 0
      %2134 = vmatpush.bf16.msra.mxu0 0
      %2135 = vmatpush.bf16.msra.mxu0 0
      %2136 = vmatpush.bf16.msra.mxu0 0
      %2137 = vmatpush.bf16.msra.mxu0 %v2104
      %2138 = vmatpush.bf16.msra.mxu0 %v2103
      %2139 = vmatmul.bf16.gmra.mxu0 %v2108
      %v2140 = vpop.f32.mrf.mxu0
      %v2141 = vadd.f32 0.0, %v2140
      %v2142 = vpop.f32.mrf.mxu0
      %v2143 = vadd.f32 0.0, %v2142
      %2144 = vmatmul.bf16.gmra.mxu0 %v2111
      %v2145 = vpop.f32.mrf.mxu0
      %v2146 = vadd.f32 0.0, %v2145
      %v2147 = vpop.f32.mrf.mxu0
      %v2148 = vadd.f32 0.0, %v2147
      %2149 = vmatmul.bf16.gmra.mxu0 %v2114
      %v2150 = vpop.f32.mrf.mxu0
      %v2151 = vadd.f32 0.0, %v2150
      %v2152 = vpop.f32.mrf.mxu0
      %v2153 = vadd.f32 0.0, %v2152
      %2154 = vmatmul.bf16.gmra.mxu0 %v2117
      %v2155 = vpop.f32.mrf.mxu0
      %v2156 = vadd.f32 0.0, %v2155
      %v2157 = vpop.f32.mrf.mxu0
      %v2158 = vadd.f32 0.0, %v2157
      %2159 = vmatmul.bf16.gmra.mxu0 %v2120
      %v2160 = vpop.f32.mrf.mxu0
      %v2161 = vadd.f32 0.0, %v2160
      %v2162 = vpop.f32.mrf.mxu0
      %v2163 = vadd.f32 0.0, %v2162
      %2164 = vmatmul.bf16.gmra.mxu0 %v2123
      %v2165 = vpop.f32.mrf.mxu0
      %v2166 = vadd.f32 0.0, %v2165
      %v2167 = vpop.f32.mrf.mxu0
      %v2168 = vadd.f32 0.0, %v2167
      %2169 = vmatmul.bf16.gmra.mxu0 %v2126
      %v2170 = vpop.f32.mrf.mxu0
      %v2171 = vadd.f32 0.0, %v2170
      %v2172 = vpop.f32.mrf.mxu0
      %v2173 = vadd.f32 0.0, %v2172
      %2174 = vmatmul.bf16.gmra.mxu0 %v2129
      %v2175 = vpop.f32.mrf.mxu0
      %v2176 = vadd.f32 0.0, %v2175
      %v2177 = vpop.f32.mrf.mxu0
      %v2178 = vadd.f32 0.0, %v2177
      %2179 = vdwg.mxu0
      %v2180 = vmax.f32 %v2141, 0.0
      %v2181 = vmax.f32 %v2143, 0.0
      %v2182 = vmax.f32 %v2146, 0.0
      %v2183 = vmax.f32 %v2148, 0.0
      %v2184 = vmax.f32 %v2151, 0.0
      %v2185 = vmax.f32 %v2153, 0.0
      %v2186 = vmax.f32 %v2156, 0.0
      %v2187 = vmax.f32 %v2158, 0.0
      %v2188 = vmax.f32 %v2161, 0.0
      %v2189 = vmax.f32 %v2163, 0.0
      %v2190 = vmax.f32 %v2166, 0.0
      %v2191 = vmax.f32 %v2168, 0.0
      %v2192 = vmax.f32 %v2171, 0.0
      %v2193 = vmax.f32 %v2173, 0.0
      %v2194 = vmax.f32 %v2176, 0.0
      %v2195 = vmax.f32 %v2178, 0.0
      %v2196 = vpack.c.bf16 %v2046, %v2044
      %v2197 = vpack.c.bf16 %v2051, %v2049
      %v2198 = vpack.c.bf16 %v2056, %v2054
      %v2199 = vpack.c.bf16 %v2061, %v2059
      %v2200 = vpack.c.bf16 %v2066, %v2064
      %v2201 = vpack.c.bf16 %v2071, %v2069
      %v2202 = vpack.c.bf16 %v2076, %v2074
      %v2203 = vpack.c.bf16 %v2081, %v2079
      %v2204 = vld [vmem:[%s5] sm:$0xf]
      %v2205 = vld [vmem:[%s5 + $0x4] sm:$0xf]
      %v2206 = vld [vmem:[%s5 + $0x8] sm:$0xf]
      %v2207 = vld [vmem:[%s5 + $0xc] sm:$0xf]
      %v2212 = vunpack.c.l.b16 %v2204
      %v2213 = vunpack.c.l.b16 %v2205
      %v2214 = vunpack.c.l.b16 %v2206
      %v2215 = vunpack.c.l.b16 %v2207
      %v2216 = vpack.c.b16 %v2213, %v2212
      %v2217 = vpack.c.b16 %v2215, %v2214
      %v2221 = vsel %vm357, %v2196, 0
      %v2224 = vsel %vm357, %v2197, 0
      %v2227 = vsel %vm357, %v2198, 0
      %v2230 = vsel %vm357, %v2199, 0
      %v2233 = vsel %vm357, %v2200, 0
      %v2236 = vsel %vm357, %v2201, 0
      %v2239 = vsel %vm357, %v2202, 0
      %v2242 = vsel %vm357, %v2203, 0
      %2244 = vmatpush.bf16.msra.mxu0 0
      %2245 = vmatpush.bf16.msra.mxu0 0
      %2246 = vmatpush.bf16.msra.mxu0 0
      %2247 = vmatpush.bf16.msra.mxu0 0
      %2248 = vmatpush.bf16.msra.mxu0 0
      %2249 = vmatpush.bf16.msra.mxu0 0
      %2250 = vmatpush.bf16.msra.mxu0 %v2217
      %2251 = vmatpush.bf16.msra.mxu0 %v2216
      %2252 = vmatmul.bf16.gmra.mxu0 %v2221
      %v2253 = vpop.f32.mrf.mxu0
      %v2254 = vadd.f32 0.0, %v2253
      %v2255 = vpop.f32.mrf.mxu0
      %v2256 = vadd.f32 0.0, %v2255
      %2257 = vmatmul.bf16.gmra.mxu0 %v2224
      %v2258 = vpop.f32.mrf.mxu0
      %v2259 = vadd.f32 0.0, %v2258
      %v2260 = vpop.f32.mrf.mxu0
      %v2261 = vadd.f32 0.0, %v2260
      %2262 = vmatmul.bf16.gmra.mxu0 %v2227
      %v2263 = vpop.f32.mrf.mxu0
      %v2264 = vadd.f32 0.0, %v2263
      %v2265 = vpop.f32.mrf.mxu0
      %v2266 = vadd.f32 0.0, %v2265
      %2267 = vmatmul.bf16.gmra.mxu0 %v2230
      %v2268 = vpop.f32.mrf.mxu0
      %v2269 = vadd.f32 0.0, %v2268
      %v2270 = vpop.f32.mrf.mxu0
      %v2271 = vadd.f32 0.0, %v2270
      %2272 = vmatmul.bf16.gmra.mxu0 %v2233
      %v2273 = vpop.f32.mrf.mxu0
      %v2274 = vadd.f32 0.0, %v2273
      %v2275 = vpop.f32.mrf.mxu0
      %v2276 = vadd.f32 0.0, %v2275
      %2277 = vmatmul.bf16.gmra.mxu0 %v2236
      %v2278 = vpop.f32.mrf.mxu0
      %v2279 = vadd.f32 0.0, %v2278
      %v2280 = vpop.f32.mrf.mxu0
      %v2281 = vadd.f32 0.0, %v2280
      %2282 = vmatmul.bf16.gmra.mxu0 %v2239
      %v2283 = vpop.f32.mrf.mxu0
      %v2284 = vadd.f32 0.0, %v2283
      %v2285 = vpop.f32.mrf.mxu0
      %v2286 = vadd.f32 0.0, %v2285
      %2287 = vmatmul.bf16.gmra.mxu0 %v2242
      %v2288 = vpop.f32.mrf.mxu0
      %v2289 = vadd.f32 0.0, %v2288
      %v2290 = vpop.f32.mrf.mxu0
      %v2291 = vadd.f32 0.0, %v2290
      %2292 = vdwg.mxu0
      %v2293 = vmax.f32 %v2254, 0.0
      %v2294 = vmax.f32 %v2256, 0.0
      %v2295 = vmax.f32 %v2259, 0.0
      %v2296 = vmax.f32 %v2261, 0.0
      %v2297 = vmax.f32 %v2264, 0.0
      %v2298 = vmax.f32 %v2266, 0.0
      %v2299 = vmax.f32 %v2269, 0.0
      %v2300 = vmax.f32 %v2271, 0.0
      %v2301 = vmax.f32 %v2274, 0.0
      %v2302 = vmax.f32 %v2276, 0.0
      %v2303 = vmax.f32 %v2279, 0.0
      %v2304 = vmax.f32 %v2281, 0.0
      %v2305 = vmax.f32 %v2284, 0.0
      %v2306 = vmax.f32 %v2286, 0.0
      %v2307 = vmax.f32 %v2289, 0.0
      %v2308 = vmax.f32 %v2291, 0.0
      %v2309 = vadd.f32 %v341, %v2180
      %v2310 = vadd.f32 %v342, %v2181
      %v2311 = vadd.f32 %v343, %v2182
      %v2312 = vadd.f32 %v344, %v2183
      %v2313 = vadd.f32 %v345, %v2184
      %v2314 = vadd.f32 %v346, %v2185
      %v2315 = vadd.f32 %v347, %v2186
      %v2316 = vadd.f32 %v348, %v2187
      %v2317 = vadd.f32 %v349, %v2188
      %v2318 = vadd.f32 %v350, %v2189
      %v2319 = vadd.f32 %v351, %v2190
      %v2320 = vadd.f32 %v352, %v2191
      %v2321 = vadd.f32 %v353, %v2192
      %v2322 = vadd.f32 %v354, %v2193
      %v2323 = vadd.f32 %v355, %v2194
      %v2324 = vadd.f32 %v356, %v2195
      %2325 = vst.msk [vmem:[%s333] sm:$0xff] %vm357, %v2309
      %2326 = vst.msk [vmem:[%s333 + $0x8] sm:$0xff] %vm357, %v2310
      %2327 = vst.msk [vmem:[%s333 + $0x10] sm:$0xff] %vm357, %v2311
      %2328 = vst.msk [vmem:[%s333 + $0x18] sm:$0xff] %vm357, %v2312
      %2329 = vst.msk [vmem:[%s333 + $0x20] sm:$0xff] %vm357, %v2313
      %2330 = vst.msk [vmem:[%s333 + $0x28] sm:$0xff] %vm357, %v2314
      %2331 = vst.msk [vmem:[%s333 + $0x30] sm:$0xff] %vm357, %v2315
      %2332 = vst.msk [vmem:[%s333 + $0x38] sm:$0xff] %vm357, %v2316
      %2333 = vst.msk [vmem:[%s333 + $0x40] sm:$0xff] %vm357, %v2317
      %2334 = vst.msk [vmem:[%s333 + $0x48] sm:$0xff] %vm357, %v2318
      %2335 = vst.msk [vmem:[%s333 + $0x50] sm:$0xff] %vm357, %v2319
      %2336 = vst.msk [vmem:[%s333 + $0x58] sm:$0xff] %vm357, %v2320
      %2337 = vst.msk [vmem:[%s333 + $0x60] sm:$0xff] %vm357, %v2321
      %2338 = vst.msk [vmem:[%s333 + $0x68] sm:$0xff] %vm357, %v2322
      %2339 = vst.msk [vmem:[%s333 + $0x70] sm:$0xff] %vm357, %v2323
      %2340 = vst.msk [vmem:[%s333 + $0x78] sm:$0xff] %vm357, %v2324
      %v2341 = vld [vmem:[%s328] sm:$0xff]
      %v2342 = vld [vmem:[%s328 + $0x8] sm:$0xff]
      %v2343 = vld [vmem:[%s328 + $0x10] sm:$0xff]
      %v2344 = vld [vmem:[%s328 + $0x18] sm:$0xff]
      %v2345 = vld [vmem:[%s328 + $0x20] sm:$0xff]
      %v2346 = vld [vmem:[%s328 + $0x28] sm:$0xff]
      %v2347 = vld [vmem:[%s328 + $0x30] sm:$0xff]
      %v2348 = vld [vmem:[%s328 + $0x38] sm:$0xff]
      %v2349 = vld [vmem:[%s328 + $0x40] sm:$0xff]
      %v2350 = vld [vmem:[%s328 + $0x48] sm:$0xff]
      %v2351 = vld [vmem:[%s328 + $0x50] sm:$0xff]
      %v2352 = vld [vmem:[%s328 + $0x58] sm:$0xff]
      %v2353 = vld [vmem:[%s328 + $0x60] sm:$0xff]
      %v2354 = vld [vmem:[%s328 + $0x68] sm:$0xff]
      %v2355 = vld [vmem:[%s328 + $0x70] sm:$0xff]
      %v2356 = vld [vmem:[%s328 + $0x78] sm:$0xff]
      %v2357 = vadd.f32 %v2341, %v2293
      %v2358 = vadd.f32 %v2342, %v2294
      %v2359 = vadd.f32 %v2343, %v2295
      %v2360 = vadd.f32 %v2344, %v2296
      %v2361 = vadd.f32 %v2345, %v2297
      %v2362 = vadd.f32 %v2346, %v2298
      %v2363 = vadd.f32 %v2347, %v2299
      %v2364 = vadd.f32 %v2348, %v2300
      %v2365 = vadd.f32 %v2349, %v2301
      %v2366 = vadd.f32 %v2350, %v2302
      %v2367 = vadd.f32 %v2351, %v2303
      %v2368 = vadd.f32 %v2352, %v2304
      %v2369 = vadd.f32 %v2353, %v2305
      %v2370 = vadd.f32 %v2354, %v2306
      %v2371 = vadd.f32 %v2355, %v2307
      %v2372 = vadd.f32 %v2356, %v2308
      %2373 = vst.msk [vmem:[%s338] sm:$0xff] %vm357, %v2357
      %2374 = vst.msk [vmem:[%s338 + $0x8] sm:$0xff] %vm357, %v2358
      %2375 = vst.msk [vmem:[%s338 + $0x10] sm:$0xff] %vm357, %v2359
      %2376 = vst.msk [vmem:[%s338 + $0x18] sm:$0xff] %vm357, %v2360
      %2377 = vst.msk [vmem:[%s338 + $0x20] sm:$0xff] %vm357, %v2361
      %2378 = vst.msk [vmem:[%s338 + $0x28] sm:$0xff] %vm357, %v2362
      %2379 = vst.msk [vmem:[%s338 + $0x30] sm:$0xff] %vm357, %v2363
      %2380 = vst.msk [vmem:[%s338 + $0x38] sm:$0xff] %vm357, %v2364
      %2381 = vst.msk [vmem:[%s338 + $0x40] sm:$0xff] %vm357, %v2365
      %2382 = vst.msk [vmem:[%s338 + $0x48] sm:$0xff] %vm357, %v2366
      %2383 = vst.msk [vmem:[%s338 + $0x50] sm:$0xff] %vm357, %v2367
      %2384 = vst.msk [vmem:[%s338 + $0x58] sm:$0xff] %vm357, %v2368
      %2385 = vst.msk [vmem:[%s338 + $0x60] sm:$0xff] %vm357, %v2369
      %2386 = vst.msk [vmem:[%s338 + $0x68] sm:$0xff] %vm357, %v2370
      %2387 = vst.msk [vmem:[%s338 + $0x70] sm:$0xff] %vm357, %v2371
      %2388 = vst.msk [vmem:[%s338 + $0x78] sm:$0xff] %vm357, %v2372
      %p2389 = scmp.lt.s32.totalorder %s20, 1
      %s2390 = scalar_select %p2389, %s20, 1
      %s2391 = smul.addr %s2390, 16
      %s2392 = smul.addr %s2391, 8
      %s2393 = scalar_lea.vmem %s7, %s2392
      %p2394 = scmp.lt.s32.totalorder %s20, 1
      %s2395 = scalar_select %p2394, %s20, 1
      %s2396 = smul.addr %s2395, 16
      %s2397 = smul.addr %s2396, 8
      %s2398 = scalar_lea.vmem %s8, %s2397
      // Predicated region
      $region49: #{tpu_custom_call.1} parent=47 // pred_check
        %p2399 = pneg %p195
      $region50: #{tpu_custom_call.1} parent=47 // pred_check_branch
        %2401 = sbr.rel (%p2399) target = $region52
      $region51: #{tpu_custom_call.1} parent=47 // pred_region
        _
      $region52: #{tpu_custom_call.1} parent=47 // pred_fallthru
        _
      // Predicated region
      $region53: #{tpu_custom_call.1} parent=47 // pred_check
        %p2402 = pneg %p221
      $region54: #{tpu_custom_call.1} parent=47 // pred_check_branch
        %2404 = sbr.rel (%p2402) target = $region56
      $region55: #{tpu_custom_call.1} parent=47 // pred_region
        _
      $region56: #{tpu_custom_call.1} parent=47 // pred_fallthru
        _
    $region48: #{tpu_custom_call.1} parent=5 // pred_fallthru
      _
    %p2405 = scmp.le.s32.totalorder 2, %s15
    // Predicated region
    $region57: #{tpu_custom_call.1} parent=5 // pred_check
      %p2406 = pneg %p2405
    $region58: #{tpu_custom_call.1} parent=5 // pred_check_branch
      %2408 = sbr.rel (%p2406) target = $region60
    $region59: #{tpu_custom_call.1} parent=5 // pred_region
      %s2409 = ssub.s32 %s15, 2
      // Predicated region
      $region61: #{tpu_custom_call.1} parent=59 // pred_check
        %p2410 = pneg %p201
      $region62: #{tpu_custom_call.1} parent=59 // pred_check_branch
        %2412 = sbr.rel (%p2410) target = $region64
      $region63: #{tpu_custom_call.1} parent=59 // pred_region
        %p2413 = scmp.lt.s32.totalorder %s21, 1
        %s2414 = scalar_select %p2413, %s21, 1
        %s2415 = smul.addr %s2414, 16
        %s2416 = smul.addr %s2415, 8
        %s2417 = scalar_lea.vmem %s7, %s2416
      $region64: #{tpu_custom_call.1} parent=59 // pred_fallthru
        _
      // Predicated region
      $region65: #{tpu_custom_call.1} parent=59 // pred_check
        %p2418 = pneg %p227
      $region66: #{tpu_custom_call.1} parent=59 // pred_check_branch
        %2420 = sbr.rel (%p2418) target = $region68
      $region67: #{tpu_custom_call.1} parent=59 // pred_region
        %p2421 = scmp.lt.s32.totalorder %s21, 1
        %s2422 = scalar_select %p2421, %s21, 1
        %s2423 = smul.addr %s2422, 16
        %s2424 = smul.addr %s2423, 8
        %s2425 = scalar_lea.vmem %s8, %s2424
      $region68: #{tpu_custom_call.1} parent=59 // pred_fallthru
        _
    $region60: #{tpu_custom_call.1} parent=5 // pred_fallthru
      _
  $region6: #{tpu_custom_call.1} parent=0 // loop_footer
    %s19 = sadd.s32 1, %s15
  $region7: #{tpu_custom_call.1} parent=0 // loop_footer_branch
    %14 = sbr.rel target = $region3
  $region8: #{tpu_custom_call.1} parent=0 // loop_exit
    _

</llo_original>
